<compile_context>
chip_gen: v6e
topology: v6e:2x2x1
jax: 0.10.0
libtpu: 0.0.40
codegen_flags: <defaults>
</compile_context>

<pallas_src>
import jax
import jax.numpy as jnp
from jax.experimental import pallas as pl
from jax.experimental.pallas import tpu as pltpu


# ------------------------------- fused kernel --------------------------------

def _decoder_kernel(x1_ref, ids_ref, lens_ref,
                    emb_ref, wimg_ref, bimg_ref,
                    wih_ref, whh_ref, blstm_ref,
                    wproj_ref, bproj_ref,
                    out_ref, hid_sc):
    N, T = ids_ref.shape
    V, D = emb_ref.shape
    H = whh_ref.shape[0]

    # ---- h0 = img2hidden(x1).view(N, H), c0 = zeros ------------------------
    h = (jnp.dot(x1_ref[...], wimg_ref[...], preferred_element_type=jnp.float32)
         + bimg_ref[...])                                        # (N, H)
    c = jnp.zeros((N, H), jnp.float32)

    # ---- word embedding as one-hot matmul (padding row of emb is zero) -----
    ids = ids_ref[...]                                           # (N, T) int32
    onehot = (ids[:, :, None]
              == jax.lax.broadcasted_iota(jnp.int32, (N, T, V), 2)
              ).astype(jnp.float32)                              # (N, T, V)
    emb = jnp.dot(onehot.reshape(N * T, V), emb_ref[...],
                  preferred_element_type=jnp.float32)            # (N*T, D)

    # ---- hoisted input projection: one matmul for all time steps -----------
    gates_x = (jnp.dot(emb, wih_ref[...], preferred_element_type=jnp.float32)
               + blstm_ref[...]).reshape(N, T, 4 * H)            # (N, T, 4H)

    lens = lens_ref[...]                                         # (N, 1) int32

    # ---- unrolled LSTM recurrence (PyTorch gate order: i, f, g, o) ----------
    # pack_padded_sequence semantics: state frozen and output zeroed past len.
    for t in range(T):
        gates = gates_x[:, t, :] + jnp.dot(
            h, whh_ref[...], preferred_element_type=jnp.float32)  # (N, 4H)
        sg = jax.nn.sigmoid(gates)      # activate the full vreg once,
        tg = jnp.tanh(gates)            # then select the gate lanes
        i_g = sg[:, 0:H]
        f_g = sg[:, H:2 * H]
        g_g = tg[:, 2 * H:3 * H]
        o_g = sg[:, 3 * H:4 * H]

        c_new = f_g * c + i_g * g_g
        h_new = o_g * jnp.tanh(c_new)

        m = (lens > t).astype(jnp.float32)                        # (N, 1)
        hid_sc[:, t, :] = m * h_new        # zeroed past length (pad_packed)
        h = m * h_new + (1.0 - m) * h      # frozen past length
        c = m * c_new + (1.0 - m) * c

    # ---- vocab projection + log_softmax (one matmul over all N*T rows) -----
    hflat = hid_sc[...].reshape(N * T, H)
    logits = (jnp.dot(hflat, wproj_ref[...], preferred_element_type=jnp.float32)
              + bproj_ref[...])                                   # (N*T, V)
    mx = jnp.max(logits, axis=-1, keepdims=True)
    s = logits - mx
    lse = jnp.log(jnp.sum(jnp.exp(s), axis=-1, keepdims=True))
    out_ref[...] = (s - lse).reshape(N, T, V)


def decoder_v0_call(params, x1, x2, x2_lens):
    N, T = x2.shape
    V, _ = params["emb"].shape
    H = params["img2hidden_w_t"].shape[1]
    return pl.pallas_call(
        _decoder_kernel,
        out_shape=jax.ShapeDtypeStruct((N, T, V), jnp.float32),
        scratch_shapes=[pltpu.VMEM((N, T, H), jnp.float32)],  # masked hidden states
    )(
        x1,
        x2.astype(jnp.int32),
        x2_lens.astype(jnp.int32).reshape(N, 1),
        params["emb"],
        params["img2hidden_w_t"], params["img2hidden_b"],
        params["lstm_wih_t"], params["lstm_whh_t"], params["lstm_b"],
        params["lstm2token_w_t"], params["lstm2token_b"],
    )


# ---------------------------- params / forward -------------------------------

def init_params(key, img_repr_size, vocab_size, hidden_dim, emb_dim,
                padding_idx=0):
    ks = jax.random.split(key, 8)
    s = 0.1
    emb = s * jax.random.normal(ks[0], (vocab_size, emb_dim), jnp.float32)
    emb = emb.at[padding_idx].set(0.0)   # nn.Embedding padding_idx => zero row
    return {
        "emb": emb,
        "img2hidden_w_t": s * jax.random.normal(ks[1], (img_repr_size, hidden_dim), jnp.float32),
        "img2hidden_b":   s * jax.random.normal(ks[2], (1, hidden_dim), jnp.float32),
        # PyTorch LSTM weight_ih_l0: (4H, D), weight_hh_l0: (4H, H) — stored
        # transposed here; lstm_b stands in for b_ih + b_hh folded into one.
        "lstm_wih_t": s * jax.random.normal(ks[3], (emb_dim, 4 * hidden_dim), jnp.float32),
        "lstm_whh_t": s * jax.random.normal(ks[4], (hidden_dim, 4 * hidden_dim), jnp.float32),
        "lstm_b":     s * jax.random.normal(ks[5], (1, 4 * hidden_dim), jnp.float32),
        "lstm2token_w_t": s * jax.random.normal(ks[6], (hidden_dim, vocab_size), jnp.float32),
        "lstm2token_b":   s * jax.random.normal(ks[7], (1, vocab_size), jnp.float32),
    }


@jax.jit
def decoder_v0_forward(params, x1, x2, x2_lens):
    """x1: (N, E) float32, x2: (N, T) int32 token ids, x2_lens: (N,) int32."""
    # TODO(synk): exact internals of LSTMNoEmbedding unavailable; standard
    # single-layer batch-first nn.LSTM with packed-sequence behavior assumed.
    return decoder_v0_call(params, x1, x2, x2_lens)


# ------------------------- pure-JAX reference (check) ------------------------

def _reference_forward(params, x1, x2, x2_lens):
    N, T = x2.shape
    H = params["img2hidden_w_t"].shape[1]
    hp = jax.lax.Precision.HIGHEST
    emb = jnp.take(params["emb"], x2, axis=0)                               # (N,T,D)
    h = jnp.dot(x1, params["img2hidden_w_t"], precision=hp) + params["img2hidden_b"]
    c = jnp.zeros_like(h)
    outs = []
    for t in range(T):
        gates = (jnp.dot(emb[:, t, :], params["lstm_wih_t"], precision=hp)
                 + jnp.dot(h, params["lstm_whh_t"], precision=hp)
                 + params["lstm_b"])
        i = jax.nn.sigmoid(gates[:, 0:H]); f = jax.nn.sigmoid(gates[:, H:2 * H])
        g = jnp.tanh(gates[:, 2 * H:3 * H]); o = jax.nn.sigmoid(gates[:, 3 * H:4 * H])
        c_new = f * c + i * g
        h_new = o * jnp.tanh(c_new)
        m = (x2_lens[:, None] > t).astype(jnp.float32)
        outs.append(m * h_new)
        h = m * h_new + (1.0 - m) * h
        c = m * c_new + (1.0 - m) * c
    hid = jnp.stack(outs, axis=1).reshape(N * T, H)
    logits = jnp.dot(hid, params["lstm2token_w_t"], precision=hp) + params["lstm2token_b"]
    return jax.nn.log_softmax(logits, axis=-1).reshape(N, T, -1)


# --------------------------------- main ---------------------------------------

if __name__ == "__main__":
    IMG_REPR_SIZE = 16   # E
    VOCAB_SIZE = 12      # len(dsl_vocab)
    HIDDEN_DIM = 32      # dsl_hidden_dim
    EMB_DIM = 16         # dsl_embedding_dim
    N, T = 2, 8

    key = jax.random.PRNGKey(0)
    k_param, k_x1, k_x2 = jax.random.split(key, 3)

    params = init_params(k_param, IMG_REPR_SIZE, VOCAB_SIZE, HIDDEN_DIM,
                         EMB_DIM, padding_idx=0)

    x1 = jax.random.normal(k_x1, (N, IMG_REPR_SIZE), jnp.float32)
    x2 = jax.random.randint(k_x2, (N, T), 0, VOCAB_SIZE, dtype=jnp.int32)
    x2_lens = jnp.array([T, 5], dtype=jnp.int32)

    out = decoder_v0_forward(params, x1, x2, x2_lens)
    jax.block_until_ready(out)

    assert out.shape == (N, T, VOCAB_SIZE)
    assert bool(jnp.all(jnp.isfinite(out)))

    ref = _reference_forward(params, x1, x2, x2_lens)
    assert jnp.allclose(out, ref, atol=1e-3, rtol=1e-3), \
        float(jnp.max(jnp.abs(out - ref)))

    print("KERNEL_OK")
</pallas_src>

<mosaic_0001>
module attributes {stable_mosaic.version = 11 : i64} {
  func.func @_decoder_kernel(%arg0: memref<2x16xf32, #tpu.memory_space<vmem>>, %arg1: memref<2x8xi32, #tpu.memory_space<vmem>>, %arg2: memref<2x1xi32, #tpu.memory_space<vmem>>, %arg3: memref<12x16xf32, #tpu.memory_space<vmem>>, %arg4: memref<16x32xf32, #tpu.memory_space<vmem>>, %arg5: memref<1x32xf32, #tpu.memory_space<vmem>>, %arg6: memref<16x128xf32, #tpu.memory_space<vmem>>, %arg7: memref<32x128xf32, #tpu.memory_space<vmem>>, %arg8: memref<1x128xf32, #tpu.memory_space<vmem>>, %arg9: memref<32x12xf32, #tpu.memory_space<vmem>>, %arg10: memref<1x12xf32, #tpu.memory_space<vmem>>, %arg11: memref<2x8x12xf32, #tpu.memory_space<vmem>>, %arg12: memref<2x8x32xf32, #tpu.memory_space<vmem>>) attributes {dimension_semantics = [], scalar_prefetch = 0 : i64, scratch_operands = 1 : i64, tpu.core_type = #tpu.core_type<tc>} {
    %c0 = arith.constant 0 : index
    %c0_0 = arith.constant 0 : index
    %0 = vector.load %arg0[%c0, %c0_0] : memref<2x16xf32, #tpu.memory_space<vmem>>, vector<2x16xf32>
    %c0_1 = arith.constant 0 : index
    %c0_2 = arith.constant 0 : index
    %1 = vector.load %arg4[%c0_1, %c0_2] : memref<16x32xf32, #tpu.memory_space<vmem>>, vector<16x32xf32>
    %cst = arith.constant dense<0.000000e+00> : vector<2x32xf32>
    %2 = tpu.matmul %0, %1, %cst {dimension_numbers = #tpu.dot_dimension_numbers<[1], [0], [0], [1], [0, 0, 1, 1], [], []>} : vector<2x16xf32>, vector<16x32xf32>, vector<2x32xf32> -> vector<2x32xf32>
    %c0_3 = arith.constant 0 : index
    %c0_4 = arith.constant 0 : index
    %3 = vector.load %arg5[%c0_3, %c0_4] : memref<1x32xf32, #tpu.memory_space<vmem>>, vector<1x32xf32>
    %4 = vector.broadcast %3 : vector<1x32xf32> to vector<2x32xf32>
    %5 = arith.addf %2, %4 : vector<2x32xf32>
    %cst_5 = arith.constant 0.000000e+00 : f32
    %6 = vector.broadcast %cst_5 : f32 to vector<2x32xf32>
    %c0_6 = arith.constant 0 : index
    %c0_7 = arith.constant 0 : index
    %7 = vector.load %arg1[%c0_6, %c0_7] : memref<2x8xi32, #tpu.memory_space<vmem>>, vector<2x8xi32>
    %8 = vector.shape_cast %7 : vector<2x8xi32> to vector<2x8x1xi32>
    %9 = tpu.iota {dimensions = array<i32: 2>} : vector<2x8x12xi32>
    %10 = vector.broadcast %8 : vector<2x8x1xi32> to vector<2x8x12xi32>
    %11 = arith.cmpi eq, %10, %9 : vector<2x8x12xi32>
    %12 = arith.extui %11 : vector<2x8x12xi1> to vector<2x8x12xi32>
    %13 = arith.sitofp %12 : vector<2x8x12xi32> to vector<2x8x12xf32>
    %14 = vector.shape_cast %13 : vector<2x8x12xf32> to vector<16x12xf32>
    %c0_8 = arith.constant 0 : index
    %c0_9 = arith.constant 0 : index
    %15 = vector.load %arg3[%c0_8, %c0_9] : memref<12x16xf32, #tpu.memory_space<vmem>>, vector<12x16xf32>
    %cst_10 = arith.constant dense<0.000000e+00> : vector<16x16xf32>
    %16 = tpu.matmul %14, %15, %cst_10 {dimension_numbers = #tpu.dot_dimension_numbers<[1], [0], [0], [1], [0, 0, 1, 1], [], []>} : vector<16x12xf32>, vector<12x16xf32>, vector<16x16xf32> -> vector<16x16xf32>
    %c0_11 = arith.constant 0 : index
    %c0_12 = arith.constant 0 : index
    %17 = vector.load %arg6[%c0_11, %c0_12] : memref<16x128xf32, #tpu.memory_space<vmem>>, vector<16x128xf32>
    %cst_13 = arith.constant dense<0.000000e+00> : vector<16x128xf32>
    %18 = tpu.matmul %16, %17, %cst_13 {dimension_numbers = #tpu.dot_dimension_numbers<[1], [0], [0], [1], [0, 0, 1, 1], [], []>} : vector<16x16xf32>, vector<16x128xf32>, vector<16x128xf32> -> vector<16x128xf32>
    %c0_14 = arith.constant 0 : index
    %c0_15 = arith.constant 0 : index
    %19 = vector.load %arg8[%c0_14, %c0_15] : memref<1x128xf32, #tpu.memory_space<vmem>>, vector<1x128xf32>
    %20 = vector.broadcast %19 : vector<1x128xf32> to vector<16x128xf32>
    %21 = arith.addf %18, %20 : vector<16x128xf32>
    %22 = vector.shape_cast %21 : vector<16x128xf32> to vector<2x8x128xf32>
    %c0_16 = arith.constant 0 : index
    %c0_17 = arith.constant 0 : index
    %23 = vector.load %arg2[%c0_16, %c0_17] : memref<2x1xi32, #tpu.memory_space<vmem>>, vector<2x1xi32>
    %24 = vector.extract_strided_slice %22 {offsets = [0, 0, 0], sizes = [2, 1, 128], strides = [1, 1, 1]} : vector<2x8x128xf32> to vector<2x1x128xf32>
    %25 = vector.shape_cast %24 : vector<2x1x128xf32> to vector<2x128xf32>
    %c0_18 = arith.constant 0 : index
    %c0_19 = arith.constant 0 : index
    %26 = vector.load %arg7[%c0_18, %c0_19] : memref<32x128xf32, #tpu.memory_space<vmem>>, vector<32x128xf32>
    %cst_20 = arith.constant dense<0.000000e+00> : vector<2x128xf32>
    %27 = tpu.matmul %5, %26, %cst_20 {dimension_numbers = #tpu.dot_dimension_numbers<[1], [0], [0], [1], [0, 0, 1, 1], [], []>} : vector<2x32xf32>, vector<32x128xf32>, vector<2x128xf32> -> vector<2x128xf32>
    %28 = arith.addf %25, %27 : vector<2x128xf32>
    %29 = arith.negf %28 : vector<2x128xf32>
    %30 = math.exp %29 : vector<2x128xf32>
    %cst_21 = arith.constant 1.000000e+00 : f32
    %31 = vector.broadcast %cst_21 : f32 to vector<2x128xf32>
    %32 = arith.addf %31, %30 : vector<2x128xf32>
    %33 = arith.divf %31, %32 : vector<2x128xf32>
    %34 = math.tanh %28 : vector<2x128xf32>
    %35 = vector.extract_strided_slice %33 {offsets = [0, 0], sizes = [2, 32], strides = [1, 1]} : vector<2x128xf32> to vector<2x32xf32>
    %36 = vector.extract_strided_slice %33 {offsets = [0, 32], sizes = [2, 32], strides = [1, 1]} : vector<2x128xf32> to vector<2x32xf32>
    %37 = vector.extract_strided_slice %34 {offsets = [0, 64], sizes = [2, 32], strides = [1, 1]} : vector<2x128xf32> to vector<2x32xf32>
    %38 = vector.extract_strided_slice %33 {offsets = [0, 96], sizes = [2, 32], strides = [1, 1]} : vector<2x128xf32> to vector<2x32xf32>
    %39 = arith.mulf %36, %6 : vector<2x32xf32>
    %40 = arith.mulf %35, %37 : vector<2x32xf32>
    %41 = arith.addf %39, %40 : vector<2x32xf32>
    %42 = math.tanh %41 : vector<2x32xf32>
    %43 = arith.mulf %38, %42 : vector<2x32xf32>
    %c0_i32 = arith.constant 0 : i32
    %44 = vector.broadcast %c0_i32 : i32 to vector<2x1xi32>
    %45 = arith.cmpi sgt, %23, %44 : vector<2x1xi32>
    %46 = arith.extui %45 : vector<2x1xi1> to vector<2x1xi32>
    %47 = arith.sitofp %46 : vector<2x1xi32> to vector<2x1xf32>
    %48 = vector.broadcast %47 : vector<2x1xf32> to vector<2x32xf32>
    %49 = arith.mulf %48, %43 : vector<2x32xf32>
    %c0_22 = arith.constant 0 : index
    %c0_23 = arith.constant 0 : index
    %c0_24 = arith.constant 0 : index
    %50 = vector.load %arg12[%c0_22, %c0_23, %c0_24] : memref<2x8x32xf32, #tpu.memory_space<vmem>>, vector<2x1x32xf32>
    %51 = vector.shape_cast %50 : vector<2x1x32xf32> to vector<2x32xf32>
    %52 = vector.shape_cast %49 : vector<2x32xf32> to vector<2x1x32xf32>
    tpu.vector_store %arg12[%c0_22, %c0_23, %c0_24], %52 {strides = array<i32>} : memref<2x8x32xf32, #tpu.memory_space<vmem>>, vector<2x1x32xf32>,
    %53 = vector.broadcast %47 : vector<2x1xf32> to vector<2x32xf32>
    %54 = arith.mulf %53, %43 : vector<2x32xf32>
    %cst_25 = arith.constant 1.000000e+00 : f32
    %55 = vector.broadcast %cst_25 : f32 to vector<2x1xf32>
    %56 = arith.subf %55, %47 : vector<2x1xf32>
    %57 = vector.broadcast %56 : vector<2x1xf32> to vector<2x32xf32>
    %58 = arith.mulf %57, %5 : vector<2x32xf32>
    %59 = arith.addf %54, %58 : vector<2x32xf32>
    %60 = vector.broadcast %47 : vector<2x1xf32> to vector<2x32xf32>
    %61 = arith.mulf %60, %41 : vector<2x32xf32>
    %cst_26 = arith.constant 1.000000e+00 : f32
    %62 = vector.broadcast %cst_26 : f32 to vector<2x1xf32>
    %63 = arith.subf %62, %47 : vector<2x1xf32>
    %64 = vector.broadcast %63 : vector<2x1xf32> to vector<2x32xf32>
    %65 = arith.mulf %64, %6 : vector<2x32xf32>
    %66 = arith.addf %61, %65 : vector<2x32xf32>
    %67 = vector.extract_strided_slice %22 {offsets = [0, 1, 0], sizes = [2, 1, 128], strides = [1, 1, 1]} : vector<2x8x128xf32> to vector<2x1x128xf32>
    %68 = vector.shape_cast %67 : vector<2x1x128xf32> to vector<2x128xf32>
    %c0_27 = arith.constant 0 : index
    %c0_28 = arith.constant 0 : index
    %69 = vector.load %arg7[%c0_27, %c0_28] : memref<32x128xf32, #tpu.memory_space<vmem>>, vector<32x128xf32>
    %cst_29 = arith.constant dense<0.000000e+00> : vector<2x128xf32>
    %70 = tpu.matmul %59, %69, %cst_29 {dimension_numbers = #tpu.dot_dimension_numbers<[1], [0], [0], [1], [0, 0, 1, 1], [], []>} : vector<2x32xf32>, vector<32x128xf32>, vector<2x128xf32> -> vector<2x128xf32>
    %71 = arith.addf %68, %70 : vector<2x128xf32>
    %72 = arith.negf %71 : vector<2x128xf32>
    %73 = math.exp %72 : vector<2x128xf32>
    %cst_30 = arith.constant 1.000000e+00 : f32
    %74 = vector.broadcast %cst_30 : f32 to vector<2x128xf32>
    %75 = arith.addf %74, %73 : vector<2x128xf32>
    %76 = arith.divf %74, %75 : vector<2x128xf32>
    %77 = math.tanh %71 : vector<2x128xf32>
    %78 = vector.extract_strided_slice %76 {offsets = [0, 0], sizes = [2, 32], strides = [1, 1]} : vector<2x128xf32> to vector<2x32xf32>
    %79 = vector.extract_strided_slice %76 {offsets = [0, 32], sizes = [2, 32], strides = [1, 1]} : vector<2x128xf32> to vector<2x32xf32>
    %80 = vector.extract_strided_slice %77 {offsets = [0, 64], sizes = [2, 32], strides = [1, 1]} : vector<2x128xf32> to vector<2x32xf32>
    %81 = vector.extract_strided_slice %76 {offsets = [0, 96], sizes = [2, 32], strides = [1, 1]} : vector<2x128xf32> to vector<2x32xf32>
    %82 = arith.mulf %79, %66 : vector<2x32xf32>
    %83 = arith.mulf %78, %80 : vector<2x32xf32>
    %84 = arith.addf %82, %83 : vector<2x32xf32>
    %85 = math.tanh %84 : vector<2x32xf32>
    %86 = arith.mulf %81, %85 : vector<2x32xf32>
    %c1_i32 = arith.constant 1 : i32
    %87 = vector.broadcast %c1_i32 : i32 to vector<2x1xi32>
    %88 = arith.cmpi sgt, %23, %87 : vector<2x1xi32>
    %89 = arith.extui %88 : vector<2x1xi1> to vector<2x1xi32>
    %90 = arith.sitofp %89 : vector<2x1xi32> to vector<2x1xf32>
    %91 = vector.broadcast %90 : vector<2x1xf32> to vector<2x32xf32>
    %92 = arith.mulf %91, %86 : vector<2x32xf32>
    %c0_31 = arith.constant 0 : index
    %c1 = arith.constant 1 : index
    %c0_32 = arith.constant 0 : index
    %93 = vector.load %arg12[%c0_31, %c1, %c0_32] : memref<2x8x32xf32, #tpu.memory_space<vmem>>, vector<2x1x32xf32>
    %94 = vector.shape_cast %93 : vector<2x1x32xf32> to vector<2x32xf32>
    %95 = vector.shape_cast %92 : vector<2x32xf32> to vector<2x1x32xf32>
    tpu.vector_store %arg12[%c0_31, %c1, %c0_32], %95 {strides = array<i32>} : memref<2x8x32xf32, #tpu.memory_space<vmem>>, vector<2x1x32xf32>,
    %96 = vector.broadcast %90 : vector<2x1xf32> to vector<2x32xf32>
    %97 = arith.mulf %96, %86 : vector<2x32xf32>
    %cst_33 = arith.constant 1.000000e+00 : f32
    %98 = vector.broadcast %cst_33 : f32 to vector<2x1xf32>
    %99 = arith.subf %98, %90 : vector<2x1xf32>
    %100 = vector.broadcast %99 : vector<2x1xf32> to vector<2x32xf32>
    %101 = arith.mulf %100, %59 : vector<2x32xf32>
    %102 = arith.addf %97, %101 : vector<2x32xf32>
    %103 = vector.broadcast %90 : vector<2x1xf32> to vector<2x32xf32>
    %104 = arith.mulf %103, %84 : vector<2x32xf32>
    %cst_34 = arith.constant 1.000000e+00 : f32
    %105 = vector.broadcast %cst_34 : f32 to vector<2x1xf32>
    %106 = arith.subf %105, %90 : vector<2x1xf32>
    %107 = vector.broadcast %106 : vector<2x1xf32> to vector<2x32xf32>
    %108 = arith.mulf %107, %66 : vector<2x32xf32>
    %109 = arith.addf %104, %108 : vector<2x32xf32>
    %110 = vector.extract_strided_slice %22 {offsets = [0, 2, 0], sizes = [2, 1, 128], strides = [1, 1, 1]} : vector<2x8x128xf32> to vector<2x1x128xf32>
    %111 = vector.shape_cast %110 : vector<2x1x128xf32> to vector<2x128xf32>
    %c0_35 = arith.constant 0 : index
    %c0_36 = arith.constant 0 : index
    %112 = vector.load %arg7[%c0_35, %c0_36] : memref<32x128xf32, #tpu.memory_space<vmem>>, vector<32x128xf32>
    %cst_37 = arith.constant dense<0.000000e+00> : vector<2x128xf32>
    %113 = tpu.matmul %102, %112, %cst_37 {dimension_numbers = #tpu.dot_dimension_numbers<[1], [0], [0], [1], [0, 0, 1, 1], [], []>} : vector<2x32xf32>, vector<32x128xf32>, vector<2x128xf32> -> vector<2x128xf32>
    %114 = arith.addf %111, %113 : vector<2x128xf32>
    %115 = arith.negf %114 : vector<2x128xf32>
    %116 = math.exp %115 : vector<2x128xf32>
    %cst_38 = arith.constant 1.000000e+00 : f32
    %117 = vector.broadcast %cst_38 : f32 to vector<2x128xf32>
    %118 = arith.addf %117, %116 : vector<2x128xf32>
    %119 = arith.divf %117, %118 : vector<2x128xf32>
    %120 = math.tanh %114 : vector<2x128xf32>
    %121 = vector.extract_strided_slice %119 {offsets = [0, 0], sizes = [2, 32], strides = [1, 1]} : vector<2x128xf32> to vector<2x32xf32>
    %122 = vector.extract_strided_slice %119 {offsets = [0, 32], sizes = [2, 32], strides = [1, 1]} : vector<2x128xf32> to vector<2x32xf32>
    %123 = vector.extract_strided_slice %120 {offsets = [0, 64], sizes = [2, 32], strides = [1, 1]} : vector<2x128xf32> to vector<2x32xf32>
    %124 = vector.extract_strided_slice %119 {offsets = [0, 96], sizes = [2, 32], strides = [1, 1]} : vector<2x128xf32> to vector<2x32xf32>
    %125 = arith.mulf %122, %109 : vector<2x32xf32>
    %126 = arith.mulf %121, %123 : vector<2x32xf32>
    %127 = arith.addf %125, %126 : vector<2x32xf32>
    %128 = math.tanh %127 : vector<2x32xf32>
    %129 = arith.mulf %124, %128 : vector<2x32xf32>
    %c2_i32 = arith.constant 2 : i32
    %130 = vector.broadcast %c2_i32 : i32 to vector<2x1xi32>
    %131 = arith.cmpi sgt, %23, %130 : vector<2x1xi32>
    %132 = arith.extui %131 : vector<2x1xi1> to vector<2x1xi32>
    %133 = arith.sitofp %132 : vector<2x1xi32> to vector<2x1xf32>
    %134 = vector.broadcast %133 : vector<2x1xf32> to vector<2x32xf32>
    %135 = arith.mulf %134, %129 : vector<2x32xf32>
    %c0_39 = arith.constant 0 : index
    %c2 = arith.constant 2 : index
    %c0_40 = arith.constant 0 : index
    %136 = vector.load %arg12[%c0_39, %c2, %c0_40] : memref<2x8x32xf32, #tpu.memory_space<vmem>>, vector<2x1x32xf32>
    %137 = vector.shape_cast %136 : vector<2x1x32xf32> to vector<2x32xf32>
    %138 = vector.shape_cast %135 : vector<2x32xf32> to vector<2x1x32xf32>
    tpu.vector_store %arg12[%c0_39, %c2, %c0_40], %138 {strides = array<i32>} : memref<2x8x32xf32, #tpu.memory_space<vmem>>, vector<2x1x32xf32>,
    %139 = vector.broadcast %133 : vector<2x1xf32> to vector<2x32xf32>
    %140 = arith.mulf %139, %129 : vector<2x32xf32>
    %cst_41 = arith.constant 1.000000e+00 : f32
    %141 = vector.broadcast %cst_41 : f32 to vector<2x1xf32>
    %142 = arith.subf %141, %133 : vector<2x1xf32>
    %143 = vector.broadcast %142 : vector<2x1xf32> to vector<2x32xf32>
    %144 = arith.mulf %143, %102 : vector<2x32xf32>
    %145 = arith.addf %140, %144 : vector<2x32xf32>
    %146 = vector.broadcast %133 : vector<2x1xf32> to vector<2x32xf32>
    %147 = arith.mulf %146, %127 : vector<2x32xf32>
    %cst_42 = arith.constant 1.000000e+00 : f32
    %148 = vector.broadcast %cst_42 : f32 to vector<2x1xf32>
    %149 = arith.subf %148, %133 : vector<2x1xf32>
    %150 = vector.broadcast %149 : vector<2x1xf32> to vector<2x32xf32>
    %151 = arith.mulf %150, %109 : vector<2x32xf32>
    %152 = arith.addf %147, %151 : vector<2x32xf32>
    %153 = vector.extract_strided_slice %22 {offsets = [0, 3, 0], sizes = [2, 1, 128], strides = [1, 1, 1]} : vector<2x8x128xf32> to vector<2x1x128xf32>
    %154 = vector.shape_cast %153 : vector<2x1x128xf32> to vector<2x128xf32>
    %c0_43 = arith.constant 0 : index
    %c0_44 = arith.constant 0 : index
    %155 = vector.load %arg7[%c0_43, %c0_44] : memref<32x128xf32, #tpu.memory_space<vmem>>, vector<32x128xf32>
    %cst_45 = arith.constant dense<0.000000e+00> : vector<2x128xf32>
    %156 = tpu.matmul %145, %155, %cst_45 {dimension_numbers = #tpu.dot_dimension_numbers<[1], [0], [0], [1], [0, 0, 1, 1], [], []>} : vector<2x32xf32>, vector<32x128xf32>, vector<2x128xf32> -> vector<2x128xf32>
    %157 = arith.addf %154, %156 : vector<2x128xf32>
    %158 = arith.negf %157 : vector<2x128xf32>
    %159 = math.exp %158 : vector<2x128xf32>
    %cst_46 = arith.constant 1.000000e+00 : f32
    %160 = vector.broadcast %cst_46 : f32 to vector<2x128xf32>
    %161 = arith.addf %160, %159 : vector<2x128xf32>
    %162 = arith.divf %160, %161 : vector<2x128xf32>
    %163 = math.tanh %157 : vector<2x128xf32>
    %164 = vector.extract_strided_slice %162 {offsets = [0, 0], sizes = [2, 32], strides = [1, 1]} : vector<2x128xf32> to vector<2x32xf32>
    %165 = vector.extract_strided_slice %162 {offsets = [0, 32], sizes = [2, 32], strides = [1, 1]} : vector<2x128xf32> to vector<2x32xf32>
    %166 = vector.extract_strided_slice %163 {offsets = [0, 64], sizes = [2, 32], strides = [1, 1]} : vector<2x128xf32> to vector<2x32xf32>
    %167 = vector.extract_strided_slice %162 {offsets = [0, 96], sizes = [2, 32], strides = [1, 1]} : vector<2x128xf32> to vector<2x32xf32>
    %168 = arith.mulf %165, %152 : vector<2x32xf32>
    %169 = arith.mulf %164, %166 : vector<2x32xf32>
    %170 = arith.addf %168, %169 : vector<2x32xf32>
    %171 = math.tanh %170 : vector<2x32xf32>
    %172 = arith.mulf %167, %171 : vector<2x32xf32>
    %c3_i32 = arith.constant 3 : i32
    %173 = vector.broadcast %c3_i32 : i32 to vector<2x1xi32>
    %174 = arith.cmpi sgt, %23, %173 : vector<2x1xi32>
    %175 = arith.extui %174 : vector<2x1xi1> to vector<2x1xi32>
    %176 = arith.sitofp %175 : vector<2x1xi32> to vector<2x1xf32>
    %177 = vector.broadcast %176 : vector<2x1xf32> to vector<2x32xf32>
    %178 = arith.mulf %177, %172 : vector<2x32xf32>
    %c0_47 = arith.constant 0 : index
    %c3 = arith.constant 3 : index
    %c0_48 = arith.constant 0 : index
    %179 = vector.load %arg12[%c0_47, %c3, %c0_48] : memref<2x8x32xf32, #tpu.memory_space<vmem>>, vector<2x1x32xf32>
    %180 = vector.shape_cast %179 : vector<2x1x32xf32> to vector<2x32xf32>
    %181 = vector.shape_cast %178 : vector<2x32xf32> to vector<2x1x32xf32>
    tpu.vector_store %arg12[%c0_47, %c3, %c0_48], %181 {strides = array<i32>} : memref<2x8x32xf32, #tpu.memory_space<vmem>>, vector<2x1x32xf32>,
    %182 = vector.broadcast %176 : vector<2x1xf32> to vector<2x32xf32>
    %183 = arith.mulf %182, %172 : vector<2x32xf32>
    %cst_49 = arith.constant 1.000000e+00 : f32
    %184 = vector.broadcast %cst_49 : f32 to vector<2x1xf32>
    %185 = arith.subf %184, %176 : vector<2x1xf32>
    %186 = vector.broadcast %185 : vector<2x1xf32> to vector<2x32xf32>
    %187 = arith.mulf %186, %145 : vector<2x32xf32>
    %188 = arith.addf %183, %187 : vector<2x32xf32>
    %189 = vector.broadcast %176 : vector<2x1xf32> to vector<2x32xf32>
    %190 = arith.mulf %189, %170 : vector<2x32xf32>
    %cst_50 = arith.constant 1.000000e+00 : f32
    %191 = vector.broadcast %cst_50 : f32 to vector<2x1xf32>
    %192 = arith.subf %191, %176 : vector<2x1xf32>
    %193 = vector.broadcast %192 : vector<2x1xf32> to vector<2x32xf32>
    %194 = arith.mulf %193, %152 : vector<2x32xf32>
    %195 = arith.addf %190, %194 : vector<2x32xf32>
    %196 = vector.extract_strided_slice %22 {offsets = [0, 4, 0], sizes = [2, 1, 128], strides = [1, 1, 1]} : vector<2x8x128xf32> to vector<2x1x128xf32>
    %197 = vector.shape_cast %196 : vector<2x1x128xf32> to vector<2x128xf32>
    %c0_51 = arith.constant 0 : index
    %c0_52 = arith.constant 0 : index
    %198 = vector.load %arg7[%c0_51, %c0_52] : memref<32x128xf32, #tpu.memory_space<vmem>>, vector<32x128xf32>
    %cst_53 = arith.constant dense<0.000000e+00> : vector<2x128xf32>
    %199 = tpu.matmul %188, %198, %cst_53 {dimension_numbers = #tpu.dot_dimension_numbers<[1], [0], [0], [1], [0, 0, 1, 1], [], []>} : vector<2x32xf32>, vector<32x128xf32>, vector<2x128xf32> -> vector<2x128xf32>
    %200 = arith.addf %197, %199 : vector<2x128xf32>
    %201 = arith.negf %200 : vector<2x128xf32>
    %202 = math.exp %201 : vector<2x128xf32>
    %cst_54 = arith.constant 1.000000e+00 : f32
    %203 = vector.broadcast %cst_54 : f32 to vector<2x128xf32>
    %204 = arith.addf %203, %202 : vector<2x128xf32>
    %205 = arith.divf %203, %204 : vector<2x128xf32>
    %206 = math.tanh %200 : vector<2x128xf32>
    %207 = vector.extract_strided_slice %205 {offsets = [0, 0], sizes = [2, 32], strides = [1, 1]} : vector<2x128xf32> to vector<2x32xf32>
    %208 = vector.extract_strided_slice %205 {offsets = [0, 32], sizes = [2, 32], strides = [1, 1]} : vector<2x128xf32> to vector<2x32xf32>
    %209 = vector.extract_strided_slice %206 {offsets = [0, 64], sizes = [2, 32], strides = [1, 1]} : vector<2x128xf32> to vector<2x32xf32>
    %210 = vector.extract_strided_slice %205 {offsets = [0, 96], sizes = [2, 32], strides = [1, 1]} : vector<2x128xf32> to vector<2x32xf32>
    %211 = arith.mulf %208, %195 : vector<2x32xf32>
    %212 = arith.mulf %207, %209 : vector<2x32xf32>
    %213 = arith.addf %211, %212 : vector<2x32xf32>
    %214 = math.tanh %213 : vector<2x32xf32>
    %215 = arith.mulf %210, %214 : vector<2x32xf32>
    %c4_i32 = arith.constant 4 : i32
    %216 = vector.broadcast %c4_i32 : i32 to vector<2x1xi32>
    %217 = arith.cmpi sgt, %23, %216 : vector<2x1xi32>
    %218 = arith.extui %217 : vector<2x1xi1> to vector<2x1xi32>
    %219 = arith.sitofp %218 : vector<2x1xi32> to vector<2x1xf32>
    %220 = vector.broadcast %219 : vector<2x1xf32> to vector<2x32xf32>
    %221 = arith.mulf %220, %215 : vector<2x32xf32>
    %c0_55 = arith.constant 0 : index
    %c4 = arith.constant 4 : index
    %c0_56 = arith.constant 0 : index
    %222 = vector.load %arg12[%c0_55, %c4, %c0_56] : memref<2x8x32xf32, #tpu.memory_space<vmem>>, vector<2x1x32xf32>
    %223 = vector.shape_cast %222 : vector<2x1x32xf32> to vector<2x32xf32>
    %224 = vector.shape_cast %221 : vector<2x32xf32> to vector<2x1x32xf32>
    tpu.vector_store %arg12[%c0_55, %c4, %c0_56], %224 {strides = array<i32>} : memref<2x8x32xf32, #tpu.memory_space<vmem>>, vector<2x1x32xf32>,
    %225 = vector.broadcast %219 : vector<2x1xf32> to vector<2x32xf32>
    %226 = arith.mulf %225, %215 : vector<2x32xf32>
    %cst_57 = arith.constant 1.000000e+00 : f32
    %227 = vector.broadcast %cst_57 : f32 to vector<2x1xf32>
    %228 = arith.subf %227, %219 : vector<2x1xf32>
    %229 = vector.broadcast %228 : vector<2x1xf32> to vector<2x32xf32>
    %230 = arith.mulf %229, %188 : vector<2x32xf32>
    %231 = arith.addf %226, %230 : vector<2x32xf32>
    %232 = vector.broadcast %219 : vector<2x1xf32> to vector<2x32xf32>
    %233 = arith.mulf %232, %213 : vector<2x32xf32>
    %cst_58 = arith.constant 1.000000e+00 : f32
    %234 = vector.broadcast %cst_58 : f32 to vector<2x1xf32>
    %235 = arith.subf %234, %219 : vector<2x1xf32>
    %236 = vector.broadcast %235 : vector<2x1xf32> to vector<2x32xf32>
    %237 = arith.mulf %236, %195 : vector<2x32xf32>
    %238 = arith.addf %233, %237 : vector<2x32xf32>
    %239 = vector.extract_strided_slice %22 {offsets = [0, 5, 0], sizes = [2, 1, 128], strides = [1, 1, 1]} : vector<2x8x128xf32> to vector<2x1x128xf32>
    %240 = vector.shape_cast %239 : vector<2x1x128xf32> to vector<2x128xf32>
    %c0_59 = arith.constant 0 : index
    %c0_60 = arith.constant 0 : index
    %241 = vector.load %arg7[%c0_59, %c0_60] : memref<32x128xf32, #tpu.memory_space<vmem>>, vector<32x128xf32>
    %cst_61 = arith.constant dense<0.000000e+00> : vector<2x128xf32>
    %242 = tpu.matmul %231, %241, %cst_61 {dimension_numbers = #tpu.dot_dimension_numbers<[1], [0], [0], [1], [0, 0, 1, 1], [], []>} : vector<2x32xf32>, vector<32x128xf32>, vector<2x128xf32> -> vector<2x128xf32>
    %243 = arith.addf %240, %242 : vector<2x128xf32>
    %244 = arith.negf %243 : vector<2x128xf32>
    %245 = math.exp %244 : vector<2x128xf32>
    %cst_62 = arith.constant 1.000000e+00 : f32
    %246 = vector.broadcast %cst_62 : f32 to vector<2x128xf32>
    %247 = arith.addf %246, %245 : vector<2x128xf32>
    %248 = arith.divf %246, %247 : vector<2x128xf32>
    %249 = math.tanh %243 : vector<2x128xf32>
    %250 = vector.extract_strided_slice %248 {offsets = [0, 0], sizes = [2, 32], strides = [1, 1]} : vector<2x128xf32> to vector<2x32xf32>
    %251 = vector.extract_strided_slice %248 {offsets = [0, 32], sizes = [2, 32], strides = [1, 1]} : vector<2x128xf32> to vector<2x32xf32>
    %252 = vector.extract_strided_slice %249 {offsets = [0, 64], sizes = [2, 32], strides = [1, 1]} : vector<2x128xf32> to vector<2x32xf32>
    %253 = vector.extract_strided_slice %248 {offsets = [0, 96], sizes = [2, 32], strides = [1, 1]} : vector<2x128xf32> to vector<2x32xf32>
    %254 = arith.mulf %251, %238 : vector<2x32xf32>
    %255 = arith.mulf %250, %252 : vector<2x32xf32>
    %256 = arith.addf %254, %255 : vector<2x32xf32>
    %257 = math.tanh %256 : vector<2x32xf32>
    %258 = arith.mulf %253, %257 : vector<2x32xf32>
    %c5_i32 = arith.constant 5 : i32
    %259 = vector.broadcast %c5_i32 : i32 to vector<2x1xi32>
    %260 = arith.cmpi sgt, %23, %259 : vector<2x1xi32>
    %261 = arith.extui %260 : vector<2x1xi1> to vector<2x1xi32>
    %262 = arith.sitofp %261 : vector<2x1xi32> to vector<2x1xf32>
    %263 = vector.broadcast %262 : vector<2x1xf32> to vector<2x32xf32>
    %264 = arith.mulf %263, %258 : vector<2x32xf32>
    %c0_63 = arith.constant 0 : index
    %c5 = arith.constant 5 : index
    %c0_64 = arith.constant 0 : index
    %265 = vector.load %arg12[%c0_63, %c5, %c0_64] : memref<2x8x32xf32, #tpu.memory_space<vmem>>, vector<2x1x32xf32>
    %266 = vector.shape_cast %265 : vector<2x1x32xf32> to vector<2x32xf32>
    %267 = vector.shape_cast %264 : vector<2x32xf32> to vector<2x1x32xf32>
    tpu.vector_store %arg12[%c0_63, %c5, %c0_64], %267 {strides = array<i32>} : memref<2x8x32xf32, #tpu.memory_space<vmem>>, vector<2x1x32xf32>,
    %268 = vector.broadcast %262 : vector<2x1xf32> to vector<2x32xf32>
    %269 = arith.mulf %268, %258 : vector<2x32xf32>
    %cst_65 = arith.constant 1.000000e+00 : f32
    %270 = vector.broadcast %cst_65 : f32 to vector<2x1xf32>
    %271 = arith.subf %270, %262 : vector<2x1xf32>
    %272 = vector.broadcast %271 : vector<2x1xf32> to vector<2x32xf32>
    %273 = arith.mulf %272, %231 : vector<2x32xf32>
    %274 = arith.addf %269, %273 : vector<2x32xf32>
    %275 = vector.broadcast %262 : vector<2x1xf32> to vector<2x32xf32>
    %276 = arith.mulf %275, %256 : vector<2x32xf32>
    %cst_66 = arith.constant 1.000000e+00 : f32
    %277 = vector.broadcast %cst_66 : f32 to vector<2x1xf32>
    %278 = arith.subf %277, %262 : vector<2x1xf32>
    %279 = vector.broadcast %278 : vector<2x1xf32> to vector<2x32xf32>
    %280 = arith.mulf %279, %238 : vector<2x32xf32>
    %281 = arith.addf %276, %280 : vector<2x32xf32>
    %282 = vector.extract_strided_slice %22 {offsets = [0, 6, 0], sizes = [2, 1, 128], strides = [1, 1, 1]} : vector<2x8x128xf32> to vector<2x1x128xf32>
    %283 = vector.shape_cast %282 : vector<2x1x128xf32> to vector<2x128xf32>
    %c0_67 = arith.constant 0 : index
    %c0_68 = arith.constant 0 : index
    %284 = vector.load %arg7[%c0_67, %c0_68] : memref<32x128xf32, #tpu.memory_space<vmem>>, vector<32x128xf32>
    %cst_69 = arith.constant dense<0.000000e+00> : vector<2x128xf32>
    %285 = tpu.matmul %274, %284, %cst_69 {dimension_numbers = #tpu.dot_dimension_numbers<[1], [0], [0], [1], [0, 0, 1, 1], [], []>} : vector<2x32xf32>, vector<32x128xf32>, vector<2x128xf32> -> vector<2x128xf32>
    %286 = arith.addf %283, %285 : vector<2x128xf32>
    %287 = arith.negf %286 : vector<2x128xf32>
    %288 = math.exp %287 : vector<2x128xf32>
    %cst_70 = arith.constant 1.000000e+00 : f32
    %289 = vector.broadcast %cst_70 : f32 to vector<2x128xf32>
    %290 = arith.addf %289, %288 : vector<2x128xf32>
    %291 = arith.divf %289, %290 : vector<2x128xf32>
    %292 = math.tanh %286 : vector<2x128xf32>
    %293 = vector.extract_strided_slice %291 {offsets = [0, 0], sizes = [2, 32], strides = [1, 1]} : vector<2x128xf32> to vector<2x32xf32>
    %294 = vector.extract_strided_slice %291 {offsets = [0, 32], sizes = [2, 32], strides = [1, 1]} : vector<2x128xf32> to vector<2x32xf32>
    %295 = vector.extract_strided_slice %292 {offsets = [0, 64], sizes = [2, 32], strides = [1, 1]} : vector<2x128xf32> to vector<2x32xf32>
    %296 = vector.extract_strided_slice %291 {offsets = [0, 96], sizes = [2, 32], strides = [1, 1]} : vector<2x128xf32> to vector<2x32xf32>
    %297 = arith.mulf %294, %281 : vector<2x32xf32>
    %298 = arith.mulf %293, %295 : vector<2x32xf32>
    %299 = arith.addf %297, %298 : vector<2x32xf32>
    %300 = math.tanh %299 : vector<2x32xf32>
    %301 = arith.mulf %296, %300 : vector<2x32xf32>
    %c6_i32 = arith.constant 6 : i32
    %302 = vector.broadcast %c6_i32 : i32 to vector<2x1xi32>
    %303 = arith.cmpi sgt, %23, %302 : vector<2x1xi32>
    %304 = arith.extui %303 : vector<2x1xi1> to vector<2x1xi32>
    %305 = arith.sitofp %304 : vector<2x1xi32> to vector<2x1xf32>
    %306 = vector.broadcast %305 : vector<2x1xf32> to vector<2x32xf32>
    %307 = arith.mulf %306, %301 : vector<2x32xf32>
    %c0_71 = arith.constant 0 : index
    %c6 = arith.constant 6 : index
    %c0_72 = arith.constant 0 : index
    %308 = vector.load %arg12[%c0_71, %c6, %c0_72] : memref<2x8x32xf32, #tpu.memory_space<vmem>>, vector<2x1x32xf32>
    %309 = vector.shape_cast %308 : vector<2x1x32xf32> to vector<2x32xf32>
    %310 = vector.shape_cast %307 : vector<2x32xf32> to vector<2x1x32xf32>
    tpu.vector_store %arg12[%c0_71, %c6, %c0_72], %310 {strides = array<i32>} : memref<2x8x32xf32, #tpu.memory_space<vmem>>, vector<2x1x32xf32>,
    %311 = vector.broadcast %305 : vector<2x1xf32> to vector<2x32xf32>
    %312 = arith.mulf %311, %301 : vector<2x32xf32>
    %cst_73 = arith.constant 1.000000e+00 : f32
    %313 = vector.broadcast %cst_73 : f32 to vector<2x1xf32>
    %314 = arith.subf %313, %305 : vector<2x1xf32>
    %315 = vector.broadcast %314 : vector<2x1xf32> to vector<2x32xf32>
    %316 = arith.mulf %315, %274 : vector<2x32xf32>
    %317 = arith.addf %312, %316 : vector<2x32xf32>
    %318 = vector.broadcast %305 : vector<2x1xf32> to vector<2x32xf32>
    %319 = arith.mulf %318, %299 : vector<2x32xf32>
    %cst_74 = arith.constant 1.000000e+00 : f32
    %320 = vector.broadcast %cst_74 : f32 to vector<2x1xf32>
    %321 = arith.subf %320, %305 : vector<2x1xf32>
    %322 = vector.broadcast %321 : vector<2x1xf32> to vector<2x32xf32>
    %323 = arith.mulf %322, %281 : vector<2x32xf32>
    %324 = arith.addf %319, %323 : vector<2x32xf32>
    %325 = vector.extract_strided_slice %22 {offsets = [0, 7, 0], sizes = [2, 1, 128], strides = [1, 1, 1]} : vector<2x8x128xf32> to vector<2x1x128xf32>
    %326 = vector.shape_cast %325 : vector<2x1x128xf32> to vector<2x128xf32>
    %c0_75 = arith.constant 0 : index
    %c0_76 = arith.constant 0 : index
    %327 = vector.load %arg7[%c0_75, %c0_76] : memref<32x128xf32, #tpu.memory_space<vmem>>, vector<32x128xf32>
    %cst_77 = arith.constant dense<0.000000e+00> : vector<2x128xf32>
    %328 = tpu.matmul %317, %327, %cst_77 {dimension_numbers = #tpu.dot_dimension_numbers<[1], [0], [0], [1], [0, 0, 1, 1], [], []>} : vector<2x32xf32>, vector<32x128xf32>, vector<2x128xf32> -> vector<2x128xf32>
    %329 = arith.addf %326, %328 : vector<2x128xf32>
    %330 = arith.negf %329 : vector<2x128xf32>
    %331 = math.exp %330 : vector<2x128xf32>
    %cst_78 = arith.constant 1.000000e+00 : f32
    %332 = vector.broadcast %cst_78 : f32 to vector<2x128xf32>
    %333 = arith.addf %332, %331 : vector<2x128xf32>
    %334 = arith.divf %332, %333 : vector<2x128xf32>
    %335 = math.tanh %329 : vector<2x128xf32>
    %336 = vector.extract_strided_slice %334 {offsets = [0, 0], sizes = [2, 32], strides = [1, 1]} : vector<2x128xf32> to vector<2x32xf32>
    %337 = vector.extract_strided_slice %334 {offsets = [0, 32], sizes = [2, 32], strides = [1, 1]} : vector<2x128xf32> to vector<2x32xf32>
    %338 = vector.extract_strided_slice %335 {offsets = [0, 64], sizes = [2, 32], strides = [1, 1]} : vector<2x128xf32> to vector<2x32xf32>
    %339 = vector.extract_strided_slice %334 {offsets = [0, 96], sizes = [2, 32], strides = [1, 1]} : vector<2x128xf32> to vector<2x32xf32>
    %340 = arith.mulf %337, %324 : vector<2x32xf32>
    %341 = arith.mulf %336, %338 : vector<2x32xf32>
    %342 = arith.addf %340, %341 : vector<2x32xf32>
    %343 = math.tanh %342 : vector<2x32xf32>
    %344 = arith.mulf %339, %343 : vector<2x32xf32>
    %c7_i32 = arith.constant 7 : i32
    %345 = vector.broadcast %c7_i32 : i32 to vector<2x1xi32>
    %346 = arith.cmpi sgt, %23, %345 : vector<2x1xi32>
    %347 = arith.extui %346 : vector<2x1xi1> to vector<2x1xi32>
    %348 = arith.sitofp %347 : vector<2x1xi32> to vector<2x1xf32>
    %349 = vector.broadcast %348 : vector<2x1xf32> to vector<2x32xf32>
    %350 = arith.mulf %349, %344 : vector<2x32xf32>
    %c0_79 = arith.constant 0 : index
    %c7 = arith.constant 7 : index
    %c0_80 = arith.constant 0 : index
    %351 = vector.load %arg12[%c0_79, %c7, %c0_80] : memref<2x8x32xf32, #tpu.memory_space<vmem>>, vector<2x1x32xf32>
    %352 = vector.shape_cast %351 : vector<2x1x32xf32> to vector<2x32xf32>
    %353 = vector.shape_cast %350 : vector<2x32xf32> to vector<2x1x32xf32>
    tpu.vector_store %arg12[%c0_79, %c7, %c0_80], %353 {strides = array<i32>} : memref<2x8x32xf32, #tpu.memory_space<vmem>>, vector<2x1x32xf32>,
    %c0_81 = arith.constant 0 : index
    %c0_82 = arith.constant 0 : index
    %c0_83 = arith.constant 0 : index
    %354 = vector.load %arg12[%c0_81, %c0_82, %c0_83] : memref<2x8x32xf32, #tpu.memory_space<vmem>>, vector<2x8x32xf32>
    %355 = vector.shape_cast %354 : vector<2x8x32xf32> to vector<16x32xf32>
    %c0_84 = arith.constant 0 : index
    %c0_85 = arith.constant 0 : index
    %356 = vector.load %arg9[%c0_84, %c0_85] : memref<32x12xf32, #tpu.memory_space<vmem>>, vector<32x12xf32>
    %cst_86 = arith.constant dense<0.000000e+00> : vector<16x12xf32>
    %357 = tpu.matmul %355, %356, %cst_86 {dimension_numbers = #tpu.dot_dimension_numbers<[1], [0], [0], [1], [0, 0, 1, 1], [], []>} : vector<16x32xf32>, vector<32x12xf32>, vector<16x12xf32> -> vector<16x12xf32>
    %c0_87 = arith.constant 0 : index
    %c0_88 = arith.constant 0 : index
    %358 = vector.load %arg10[%c0_87, %c0_88] : memref<1x12xf32, #tpu.memory_space<vmem>>, vector<1x12xf32>
    %359 = vector.broadcast %358 : vector<1x12xf32> to vector<16x12xf32>
    %360 = arith.addf %357, %359 : vector<16x12xf32>
    %cst_89 = arith.constant dense<0xFF800000> : vector<16xf32>
    %361 = vector.multi_reduction <maximumf>, %360, %cst_89 [1] : vector<16x12xf32> to vector<16xf32>
    %362 = vector.shape_cast %361 : vector<16xf32> to vector<16x1xf32>
    %363 = vector.broadcast %362 : vector<16x1xf32> to vector<16x12xf32>
    %364 = arith.subf %360, %363 : vector<16x12xf32>
    %365 = math.exp %364 : vector<16x12xf32>
    %cst_90 = arith.constant dense<0.000000e+00> : vector<16xf32>
    %366 = vector.multi_reduction <add>, %365, %cst_90 [1] : vector<16x12xf32> to vector<16xf32>
    %367 = vector.shape_cast %366 : vector<16xf32> to vector<16x1xf32>
    %368 = math.log %367 : vector<16x1xf32>
    %369 = vector.broadcast %368 : vector<16x1xf32> to vector<16x12xf32>
    %370 = arith.subf %364, %369 : vector<16x12xf32>
    %371 = vector.shape_cast %370 : vector<16x12xf32> to vector<2x8x12xf32>
    %c0_91 = arith.constant 0 : index
    %c0_92 = arith.constant 0 : index
    %c0_93 = arith.constant 0 : index
    %372 = vector.load %arg11[%c0_91, %c0_92, %c0_93] : memref<2x8x12xf32, #tpu.memory_space<vmem>>, vector<2x8x12xf32>
    tpu.vector_store %arg11[%c0_91, %c0_92, %c0_93], %371 {strides = array<i32>} : memref<2x8x12xf32, #tpu.memory_space<vmem>>, vector<2x8x12xf32>,
    return
  }
}

</mosaic_0001>

<llo_original>
// kernel: decoder_v0_forward.1
$region0: #{decoder_v0_forward.1}
  #allocation0 [shape = 'u32[]', space=smem, size = 0x4, offset = 0x4, fixed_abs, tag = 'smem constant byte address 0x4 - core index']
  #allocation1 [shape = 'u32[144,128]{1,0:T(1,128)}', space=vmem, size = 0x12000, scoped, tag = 'internal scratch']
  #allocation2 [shape = 'f32[2,8,32]{2,1,0:T(8,128)}', space=vmem, size = 0x2000, scoped, tag = 'scratch operand']
  %s0 = inlined_call_operand.vmem [shape: f32[2,16], index: 0, kind: input, shape index: {}]
  %s1 = inlined_call_operand.vmem [shape: s32[2,8], index: 1, kind: input, shape index: {}]
  %s2 = inlined_call_operand.vmem [shape: s32[2,1], index: 2, kind: input, shape index: {}]
  %s3 = inlined_call_operand.vmem [shape: f32[12,16], index: 3, kind: input, shape index: {}]
  %s4 = inlined_call_operand.hbm [shape: f32[16,32], index: 4, kind: input, shape index: {}]
  %s5 = inlined_call_operand.hbm [shape: f32[1,32], index: 5, kind: input, shape index: {}]
  %s6 = inlined_call_operand.vmem [shape: f32[16,128], index: 6, kind: input, shape index: {}]
  %s7 = inlined_call_operand.vmem [shape: f32[32,128], index: 7, kind: input, shape index: {}]
  %s8 = inlined_call_operand.hbm [shape: f32[1,128], index: 8, kind: input, shape index: {}]
  %s9 = inlined_call_operand.vmem [shape: f32[32,12], index: 9, kind: input, shape index: {}]
  %s10 = inlined_call_operand.hbm [shape: f32[1,12], index: 10, kind: input, shape index: {}]
  %s11 = inlined_call_operand.hbm [shape: f32[2,8,12], index: 11, kind: output, shape index: {}]
  %s12 = sld [smem:[#allocation0]]
  $region70: #{decoder_v0_forward.1} parent=0
    _
  %s14 = ssub.s32 1, %s12
  %s15 = scalar_select 0, %s14, %s12
  $region1: #{decoder_v0_forward.1} parent=0
    #allocation3 [shape = 'u8[8192]{0}', space=vmem, size = 0x2000, scoped, tag = 'input window, operand 4, single buffered']
    #allocation4 [shape = 's32[1]{0}', space=sflag, size = 0x4, scoped, tag = 'scoped memory for decoder_v0_forward.1']
    #allocation5 [shape = 's32[1]{0}', space=sflag, size = 0x4, scoped, tag = 'scoped memory for decoder_v0_forward.1']
    #allocation6 [shape = 'u8[512]{0}', space=vmem, size = 0x400, scoped, tag = 'input window, operand 5, single buffered']
    #allocation7 [shape = 's32[1]{0}', space=sflag, size = 0x4, scoped, tag = 'scoped memory for decoder_v0_forward.1']
    #allocation8 [shape = 'u8[512]{0}', space=vmem, size = 0x400, scoped, tag = 'input window, operand 8, single buffered']
    #allocation9 [shape = 'u8[512]{0}', space=vmem, size = 0x400, scoped, tag = 'input window, operand 10, single buffered']
    #allocation10 [shape = 's32[1]{0}', space=sflag, size = 0x4, scoped, tag = 'scoped memory for decoder_v0_forward.1']
    #allocation11 [shape = 'u8[8192]{0}', space=vmem, size = 0x2000, scoped, tag = 'output window, operand 0, single buffered']
    %16 = vsyncpa [#allocation4], 0
    %17 = vsyncpa [#allocation7], 0
    %18 = vsyncpa [#allocation10], 0
    %19 = vsyncpa [#allocation5], 0
    // Predicated region
    $region2: #{decoder_v0_forward.1} parent=1 // pred_check
      _
    $region3: #{decoder_v0_forward.1} parent=1 // pred_check_branch
      %21 = sbr.rel (0) target = $region5
    $region4: #{decoder_v0_forward.1} parent=1 // pred_region
      _
    $region5: #{decoder_v0_forward.1} parent=1 // pred_fallthru
      _
    // Predicated region
    $region6: #{decoder_v0_forward.1} parent=1 // pred_check
      _
    $region7: #{decoder_v0_forward.1} parent=1 // pred_check_branch
      %23 = sbr.rel (0) target = $region9
    $region8: #{decoder_v0_forward.1} parent=1 // pred_region
      _
    $region9: #{decoder_v0_forward.1} parent=1 // pred_fallthru
      _
    // Predicated region
    $region10: #{decoder_v0_forward.1} parent=1 // pred_check
      _
    $region11: #{decoder_v0_forward.1} parent=1 // pred_check_branch
      %25 = sbr.rel (0) target = $region13
    $region12: #{decoder_v0_forward.1} parent=1 // pred_region
      _
    $region13: #{decoder_v0_forward.1} parent=1 // pred_fallthru
      _
    // Predicated region
    $region14: #{decoder_v0_forward.1} parent=1 // pred_check
      _
    $region15: #{decoder_v0_forward.1} parent=1 // pred_check_branch
      %27 = sbr.rel (0) target = $region17
    $region16: #{decoder_v0_forward.1} parent=1 // pred_region
      _
    $region17: #{decoder_v0_forward.1} parent=1 // pred_fallthru
      _
    // Predicated region
    $region18: #{decoder_v0_forward.1} parent=1 // pred_check
      _
    $region19: #{decoder_v0_forward.1} parent=1 // pred_check_branch
      %29 = sbr.rel (0) target = $region21
    $region20: #{decoder_v0_forward.1} parent=1 // pred_region
      %s31 = ssub.s32 256, 256
      %32 = vsyncadd [#allocation4], %s31
      %s33 = sshll.u32 [#allocation3], 4
      %s34 = int_to_ptr.vmem [resolvable:$true] %s33
      %39 = dma.hbm_to_vmem [thread:$0]  %s4, 256, %s34, [#allocation4], 128, 128, 8
    $region21: #{decoder_v0_forward.1} parent=1 // pred_fallthru
      _
    // Predicated region
    $region22: #{decoder_v0_forward.1} parent=1 // pred_check
      _
    $region23: #{decoder_v0_forward.1} parent=1 // pred_check_branch
      %41 = sbr.rel (0) target = $region25
    $region24: #{decoder_v0_forward.1} parent=1 // pred_region
      %s43 = ssub.s32 16, 16
      %44 = vsyncadd [#allocation7], %s43
      %s46 = sshll.u32 [#allocation6], 4
      %s47 = int_to_ptr.vmem [resolvable:$true] %s46
      %49 = dma.hbm_to_vmem [thread:$0]  %s5, 16, %s47, [#allocation7]
    $region25: #{decoder_v0_forward.1} parent=1 // pred_fallthru
      _
    // Predicated region
    $region26: #{decoder_v0_forward.1} parent=1 // pred_check
      _
    $region27: #{decoder_v0_forward.1} parent=1 // pred_check_branch
      %51 = sbr.rel (0) target = $region29
    $region28: #{decoder_v0_forward.1} parent=1 // pred_region
      _
    $region29: #{decoder_v0_forward.1} parent=1 // pred_fallthru
      _
    // Predicated region
    $region30: #{decoder_v0_forward.1} parent=1 // pred_check
      _
    $region31: #{decoder_v0_forward.1} parent=1 // pred_check_branch
      %53 = sbr.rel (0) target = $region33
    $region32: #{decoder_v0_forward.1} parent=1 // pred_region
      _
    $region33: #{decoder_v0_forward.1} parent=1 // pred_fallthru
      _
    // Predicated region
    $region34: #{decoder_v0_forward.1} parent=1 // pred_check
      _
    $region35: #{decoder_v0_forward.1} parent=1 // pred_check_branch
      %55 = sbr.rel (0) target = $region37
    $region36: #{decoder_v0_forward.1} parent=1 // pred_region
      %s57 = ssub.s32 16, 16
      %58 = vsyncadd [#allocation7], %s57
      %s60 = sshll.u32 [#allocation8], 4
      %s61 = int_to_ptr.vmem [resolvable:$true] %s60
      %63 = dma.hbm_to_vmem [thread:$0]  %s8, 16, %s61, [#allocation7]
    $region37: #{decoder_v0_forward.1} parent=1 // pred_fallthru
      _
    // Predicated region
    $region38: #{decoder_v0_forward.1} parent=1 // pred_check
      _
    $region39: #{decoder_v0_forward.1} parent=1 // pred_check_branch
      %65 = sbr.rel (0) target = $region41
    $region40: #{decoder_v0_forward.1} parent=1 // pred_region
      _
    $region41: #{decoder_v0_forward.1} parent=1 // pred_fallthru
      _
    // Predicated region
    $region42: #{decoder_v0_forward.1} parent=1 // pred_check
      _
    $region43: #{decoder_v0_forward.1} parent=1 // pred_check_branch
      %67 = sbr.rel (0) target = $region45
    $region44: #{decoder_v0_forward.1} parent=1 // pred_region
      %s69 = ssub.s32 16, 16
      %70 = vsyncadd [#allocation10], %s69
      %s72 = sshll.u32 [#allocation9], 4
      %s73 = int_to_ptr.vmem [resolvable:$true] %s72
      %75 = dma.hbm_to_vmem [thread:$0]  %s10, 16, %s73, [#allocation10]
    $region45: #{decoder_v0_forward.1} parent=1 // pred_fallthru
      _
    // Predicated region
    $region46: #{decoder_v0_forward.1} parent=1 // pred_check
      _
    $region47: #{decoder_v0_forward.1} parent=1 // pred_check_branch
      %77 = sbr.rel (0) target = $region49
    $region48: #{decoder_v0_forward.1} parent=1 // pred_region
      %78 = dma.done [#allocation4], 256
    $region49: #{decoder_v0_forward.1} parent=1 // pred_fallthru
      _
    // Predicated region
    $region50: #{decoder_v0_forward.1} parent=1 // pred_check
      _
    $region51: #{decoder_v0_forward.1} parent=1 // pred_check_branch
      %80 = sbr.rel (0) target = $region53
    $region52: #{decoder_v0_forward.1} parent=1 // pred_region
      %81 = dma.done [#allocation7], 16
    $region53: #{decoder_v0_forward.1} parent=1 // pred_fallthru
      _
    // Predicated region
    $region54: #{decoder_v0_forward.1} parent=1 // pred_check
      _
    $region55: #{decoder_v0_forward.1} parent=1 // pred_check_branch
      %83 = sbr.rel (0) target = $region57
    $region56: #{decoder_v0_forward.1} parent=1 // pred_region
      %84 = dma.done [#allocation7], 16
    $region57: #{decoder_v0_forward.1} parent=1 // pred_fallthru
      _
    // Predicated region
    $region58: #{decoder_v0_forward.1} parent=1 // pred_check
      _
    $region59: #{decoder_v0_forward.1} parent=1 // pred_check_branch
      %86 = sbr.rel (0) target = $region61
    $region60: #{decoder_v0_forward.1} parent=1 // pred_region
      %87 = dma.done [#allocation10], 16
    $region61: #{decoder_v0_forward.1} parent=1 // pred_fallthru
      _
    %v88 = vld [vmem:[%s0] sm:$0x3]
    %v89 = vld [vmem:[#allocation3] sm:$0xff]
    %v90 = vld [vmem:[#allocation3 + $0x8] sm:$0xff]
    %v91 = vld [vmem:[#allocation6] sm:$0x1]
    %v93 = vlaneseq
    %v94 = vshrl.u32 %v93, 7
    %v95 = vsub.s32 0, %v94
    %v96 = vrot.slane %v91, %v95
    %vm98 = vcmask 130048
    %v100 = vsel %vm98, %v88, 0
    %102 = vmatprep.subr.mxu0 0.0
    %103 = vmatpush1.msra.mxu0 0.0
    %104 = vmatprep.subr.mxu0 0.0
    %105 = vmatpush1.msra.mxu0 0.0
    %106 = vmatprep.subr.mxu0 0.0
    %107 = vmatpush1.msra.mxu0 0.0
    %108 = vmatprep.subr.mxu0 0.0
    %109 = vmatpush1.msra.mxu0 0.0
    %110 = vmatprep.subr.mxu0 0.0
    %111 = vmatpush1.msra.mxu0 0.0
    %112 = vmatprep.subr.mxu0 0.0
    %113 = vmatpush1.msra.mxu0 0.0
    %114 = vmatprep.subr.mxu0 0.0
    %115 = vmatpush1.msra.mxu0 0.0
    %116 = vmatprep.subr.mxu0 0.0
    %117 = vmatpush1.msra.mxu0 0.0
    %118 = vmatprep.subr.mxu0 0.0
    %119 = vmatpush1.msra.mxu0 0.0
    %120 = vmatprep.subr.mxu0 0.0
    %121 = vmatpush1.msra.mxu0 0.0
    %122 = vmatprep.subr.mxu0 0.0
    %123 = vmatpush1.msra.mxu0 0.0
    %124 = vmatprep.subr.mxu0 0.0
    %125 = vmatpush1.msra.mxu0 0.0
    %126 = vmatprep.subr.mxu0 0.0
    %127 = vmatpush1.msra.mxu0 0.0
    %128 = vmatprep.subr.mxu0 0.0
    %129 = vmatpush1.msra.mxu0 0.0
    %130 = vmatprep.subr.mxu0 0.0
    %131 = vmatpush1.msra.mxu0 %v90
    %132 = vmatprep.subr.mxu0 0.0
    %133 = vmatpush1.msra.mxu0 %v89
    %134 = vmatprep.subr.mxu0 0.0
    %135 = vmatpush2.msra.mxu0 0.0
    %136 = vmatprep.subr.mxu0 0.0
    %137 = vmatpush2.msra.mxu0 0.0
    %138 = vmatprep.subr.mxu0 0.0
    %139 = vmatpush2.msra.mxu0 0.0
    %140 = vmatprep.subr.mxu0 0.0
    %141 = vmatpush2.msra.mxu0 0.0
    %142 = vmatprep.subr.mxu0 0.0
    %143 = vmatpush2.msra.mxu0 0.0
    %144 = vmatprep.subr.mxu0 0.0
    %145 = vmatpush2.msra.mxu0 0.0
    %146 = vmatprep.subr.mxu0 0.0
    %147 = vmatpush2.msra.mxu0 0.0
    %148 = vmatprep.subr.mxu0 0.0
    %149 = vmatpush2.msra.mxu0 0.0
    %150 = vmatprep.subr.mxu0 0.0
    %151 = vmatpush2.msra.mxu0 0.0
    %152 = vmatprep.subr.mxu0 0.0
    %153 = vmatpush2.msra.mxu0 0.0
    %154 = vmatprep.subr.mxu0 0.0
    %155 = vmatpush2.msra.mxu0 0.0
    %156 = vmatprep.subr.mxu0 0.0
    %157 = vmatpush2.msra.mxu0 0.0
    %158 = vmatprep.subr.mxu0 0.0
    %159 = vmatpush2.msra.mxu0 0.0
    %160 = vmatprep.subr.mxu0 0.0
    %161 = vmatpush2.msra.mxu0 0.0
    %162 = vmatprep.subr.mxu0 0.0
    %163 = vmatpush2.msra.mxu0 0.0
    %164 = vmatprep.subr.mxu0 0.0
    %165 = vmatpush2.msra.mxu0 0.0
    %166 = vmatprep.mubr.f32.mxu0 0.0
    %167 = vmatmul.mubr.f32.gmra.mxu0 %v100
    %v168 = vpop.f32.mrf.mxu0
    %v169 = vadd.f32 %v96, %v168
    %v170 = vpop.f32.mrf.mxu0
    %171 = vdwg.mxu0
    %v172 = vld [vmem:[%s1] sm:$0x3]
    %v173 = vlaneseq
    %v174 = vshrl.u32 %v173, 7
    %v175 = vsub.s32 0, %v174
    %v176 = vrot.slane %v172, %v175
    %178 = vbcast.lane.b32.xlu0 %v176, 256
    %v179 = vpop.permute.xlu0 %178
    %v180 = vlaneseq
    %v181 = vshrl.u32 %v180, 7
    %v182 = vsub.s32 1, %v181
    %v183 = vrot.slane %v172, %v182
    %185 = vbcast.lane.b32.xlu0 %v183, 256
    %v186 = vpop.permute.xlu0 %185
    %v187 = vlaneseq
    %v188 = vand.u32 %v187, 127
    %vm189 = vcmp.eq.s32.totalorder %v179, %v188
    %vm190 = vcmp.eq.s32.totalorder %v186, %v188
    %v191 = vsel %vm189, 1, 0
    %v192 = vsel %vm190, 1, 0
    %v193 = vcvt.s32.f32 %v191
    %v194 = vcvt.s32.f32 %v192
    %v195 = vld [vmem:[%s3] sm:$0xff]
    %v196 = vld [vmem:[%s3 + $0x8] sm:$0xf]
    %vm197 = vcmask 97280
    %v199 = vsel %vm197, %v193, 0
    %v202 = vsel %vm197, %v194, 0
    %vm204 = vcmask 1043456
    %v206 = vsel %vm204, %v196, 0
    %208 = vmatprep.subr.mxu0 0.0
    %209 = vmatpush1.msra.mxu0 0.0
    %210 = vmatprep.subr.mxu0 0.0
    %211 = vmatpush1.msra.mxu0 0.0
    %212 = vmatprep.subr.mxu0 0.0
    %213 = vmatpush1.msra.mxu0 0.0
    %214 = vmatprep.subr.mxu0 0.0
    %215 = vmatpush1.msra.mxu0 0.0
    %216 = vmatprep.subr.mxu0 0.0
    %217 = vmatpush1.msra.mxu0 0.0
    %218 = vmatprep.subr.mxu0 0.0
    %219 = vmatpush1.msra.mxu0 0.0
    %220 = vmatprep.subr.mxu0 0.0
    %221 = vmatpush1.msra.mxu0 0.0
    %222 = vmatprep.subr.mxu0 0.0
    %223 = vmatpush1.msra.mxu0 0.0
    %224 = vmatprep.subr.mxu0 0.0
    %225 = vmatpush1.msra.mxu0 0.0
    %226 = vmatprep.subr.mxu0 0.0
    %227 = vmatpush1.msra.mxu0 0.0
    %228 = vmatprep.subr.mxu0 0.0
    %229 = vmatpush1.msra.mxu0 0.0
    %230 = vmatprep.subr.mxu0 0.0
    %231 = vmatpush1.msra.mxu0 0.0
    %232 = vmatprep.subr.mxu0 0.0
    %233 = vmatpush1.msra.mxu0 0.0
    %234 = vmatprep.subr.mxu0 0.0
    %235 = vmatpush1.msra.mxu0 0.0
    %236 = vmatprep.subr.mxu0 0.0
    %237 = vmatpush1.msra.mxu0 %v206
    %238 = vmatprep.subr.mxu0 0.0
    %239 = vmatpush1.msra.mxu0 %v195
    %240 = vmatprep.subr.mxu0 0.0
    %241 = vmatpush2.msra.mxu0 0.0
    %242 = vmatprep.subr.mxu0 0.0
    %243 = vmatpush2.msra.mxu0 0.0
    %244 = vmatprep.subr.mxu0 0.0
    %245 = vmatpush2.msra.mxu0 0.0
    %246 = vmatprep.subr.mxu0 0.0
    %247 = vmatpush2.msra.mxu0 0.0
    %248 = vmatprep.subr.mxu0 0.0
    %249 = vmatpush2.msra.mxu0 0.0
    %250 = vmatprep.subr.mxu0 0.0
    %251 = vmatpush2.msra.mxu0 0.0
    %252 = vmatprep.subr.mxu0 0.0
    %253 = vmatpush2.msra.mxu0 0.0
    %254 = vmatprep.subr.mxu0 0.0
    %255 = vmatpush2.msra.mxu0 0.0
    %256 = vmatprep.subr.mxu0 0.0
    %257 = vmatpush2.msra.mxu0 0.0
    %258 = vmatprep.subr.mxu0 0.0
    %259 = vmatpush2.msra.mxu0 0.0
    %260 = vmatprep.subr.mxu0 0.0
    %261 = vmatpush2.msra.mxu0 0.0
    %262 = vmatprep.subr.mxu0 0.0
    %263 = vmatpush2.msra.mxu0 0.0
    %264 = vmatprep.subr.mxu0 0.0
    %265 = vmatpush2.msra.mxu0 0.0
    %266 = vmatprep.subr.mxu0 0.0
    %267 = vmatpush2.msra.mxu0 0.0
    %268 = vmatprep.subr.mxu0 0.0
    %269 = vmatpush2.msra.mxu0 0.0
    %270 = vmatprep.subr.mxu0 0.0
    %271 = vmatpush2.msra.mxu0 0.0
    %272 = vmatprep.mubr.f32.mxu0 0.0
    %273 = vmatmul.mubr.f32.gmra.mxu0 %v199
    %v274 = vpop.f32.mrf.mxu0
    %v275 = vadd.f32 0.0, %v274
    %v276 = vpop.f32.mrf.mxu0
    %277 = vmatprep.mubr.f32.mxu0 0.0
    %278 = vmatmul.mubr.f32.gmra.mxu0 %v202
    %v279 = vpop.f32.mrf.mxu0
    %v280 = vadd.f32 0.0, %v279
    %v281 = vpop.f32.mrf.mxu0
    %282 = vdwg.mxu0
    %v283 = vld [vmem:[%s6] sm:$0xff]
    %v284 = vld [vmem:[%s6 + $0x8] sm:$0xff]
    %v285 = vld [vmem:[#allocation8] sm:$0x1]
    %v287 = vlaneseq
    %v288 = vshrl.u32 %v287, 7
    %v289 = vsub.s32 0, %v288
    %v290 = vrot.slane %v285, %v289
    %v293 = vsel %vm98, %v275, 0
    %v296 = vsel %vm98, %v280, 0
    %298 = vmatprep.subr.mxu0 0.0
    %299 = vmatpush1.msra.mxu0 0.0
    %300 = vmatprep.subr.mxu0 0.0
    %301 = vmatpush1.msra.mxu0 0.0
    %302 = vmatprep.subr.mxu0 0.0
    %303 = vmatpush1.msra.mxu0 0.0
    %304 = vmatprep.subr.mxu0 0.0
    %305 = vmatpush1.msra.mxu0 0.0
    %306 = vmatprep.subr.mxu0 0.0
    %307 = vmatpush1.msra.mxu0 0.0
    %308 = vmatprep.subr.mxu0 0.0
    %309 = vmatpush1.msra.mxu0 0.0
    %310 = vmatprep.subr.mxu0 0.0
    %311 = vmatpush1.msra.mxu0 0.0
    %312 = vmatprep.subr.mxu0 0.0
    %313 = vmatpush1.msra.mxu0 0.0
    %314 = vmatprep.subr.mxu0 0.0
    %315 = vmatpush1.msra.mxu0 0.0
    %316 = vmatprep.subr.mxu0 0.0
    %317 = vmatpush1.msra.mxu0 0.0
    %318 = vmatprep.subr.mxu0 0.0
    %319 = vmatpush1.msra.mxu0 0.0
    %320 = vmatprep.subr.mxu0 0.0
    %321 = vmatpush1.msra.mxu0 0.0
    %322 = vmatprep.subr.mxu0 0.0
    %323 = vmatpush1.msra.mxu0 0.0
    %324 = vmatprep.subr.mxu0 0.0
    %325 = vmatpush1.msra.mxu0 0.0
    %326 = vmatprep.subr.mxu0 0.0
    %327 = vmatpush1.msra.mxu0 %v284
    %328 = vmatprep.subr.mxu0 0.0
    %329 = vmatpush1.msra.mxu0 %v283
    %330 = vmatprep.subr.mxu0 0.0
    %331 = vmatpush2.msra.mxu0 0.0
    %332 = vmatprep.subr.mxu0 0.0
    %333 = vmatpush2.msra.mxu0 0.0
    %334 = vmatprep.subr.mxu0 0.0
    %335 = vmatpush2.msra.mxu0 0.0
    %336 = vmatprep.subr.mxu0 0.0
    %337 = vmatpush2.msra.mxu0 0.0
    %338 = vmatprep.subr.mxu0 0.0
    %339 = vmatpush2.msra.mxu0 0.0
    %340 = vmatprep.subr.mxu0 0.0
    %341 = vmatpush2.msra.mxu0 0.0
    %342 = vmatprep.subr.mxu0 0.0
    %343 = vmatpush2.msra.mxu0 0.0
    %344 = vmatprep.subr.mxu0 0.0
    %345 = vmatpush2.msra.mxu0 0.0
    %346 = vmatprep.subr.mxu0 0.0
    %347 = vmatpush2.msra.mxu0 0.0
    %348 = vmatprep.subr.mxu0 0.0
    %349 = vmatpush2.msra.mxu0 0.0
    %350 = vmatprep.subr.mxu0 0.0
    %351 = vmatpush2.msra.mxu0 0.0
    %352 = vmatprep.subr.mxu0 0.0
    %353 = vmatpush2.msra.mxu0 0.0
    %354 = vmatprep.subr.mxu0 0.0
    %355 = vmatpush2.msra.mxu0 0.0
    %356 = vmatprep.subr.mxu0 0.0
    %357 = vmatpush2.msra.mxu0 0.0
    %358 = vmatprep.subr.mxu0 0.0
    %359 = vmatpush2.msra.mxu0 0.0
    %360 = vmatprep.subr.mxu0 0.0
    %361 = vmatpush2.msra.mxu0 0.0
    %362 = vmatprep.mubr.f32.mxu0 0.0
    %363 = vmatmul.mubr.f32.gmra.mxu0 %v293
    %v364 = vpop.f32.mrf.mxu0
    %v365 = vadd.f32 %v290, %v364
    %v366 = vpop.f32.mrf.mxu0
    %367 = vmatprep.mubr.f32.mxu0 0.0
    %368 = vmatmul.mubr.f32.gmra.mxu0 %v296
    %v369 = vpop.f32.mrf.mxu0
    %v370 = vadd.f32 %v290, %v369
    %v371 = vpop.f32.mrf.mxu0
    %372 = vdwg.mxu0
    %v373 = vld [vmem:[%s2] sm:$0x3]
    %v374 = vld [vmem:[%s7] sm:$0xff]
    %v375 = vld [vmem:[%s7 + $0x8] sm:$0xff]
    %v376 = vld [vmem:[%s7 + $0x10] sm:$0xff]
    %v377 = vld [vmem:[%s7 + $0x18] sm:$0xff]
    %vm378 = vcmask 261120
    %v380 = vsel %vm378, %v169, 0
    %382 = vmatprep.subr.mxu0 0.0
    %383 = vmatpush1.msra.mxu0 0.0
    %384 = vmatprep.subr.mxu0 0.0
    %385 = vmatpush1.msra.mxu0 0.0
    %386 = vmatprep.subr.mxu0 0.0
    %387 = vmatpush1.msra.mxu0 0.0
    %388 = vmatprep.subr.mxu0 0.0
    %389 = vmatpush1.msra.mxu0 0.0
    %390 = vmatprep.subr.mxu0 0.0
    %391 = vmatpush1.msra.mxu0 0.0
    %392 = vmatprep.subr.mxu0 0.0
    %393 = vmatpush1.msra.mxu0 0.0
    %394 = vmatprep.subr.mxu0 0.0
    %395 = vmatpush1.msra.mxu0 0.0
    %396 = vmatprep.subr.mxu0 0.0
    %397 = vmatpush1.msra.mxu0 0.0
    %398 = vmatprep.subr.mxu0 0.0
    %399 = vmatpush1.msra.mxu0 0.0
    %400 = vmatprep.subr.mxu0 0.0
    %401 = vmatpush1.msra.mxu0 0.0
    %402 = vmatprep.subr.mxu0 0.0
    %403 = vmatpush1.msra.mxu0 0.0
    %404 = vmatprep.subr.mxu0 0.0
    %405 = vmatpush1.msra.mxu0 0.0
    %406 = vmatprep.subr.mxu0 0.0
    %407 = vmatpush1.msra.mxu0 %v377
    %408 = vmatprep.subr.mxu0 0.0
    %409 = vmatpush1.msra.mxu0 %v376
    %410 = vmatprep.subr.mxu0 0.0
    %411 = vmatpush1.msra.mxu0 %v375
    %412 = vmatprep.subr.mxu0 0.0
    %413 = vmatpush1.msra.mxu0 %v374
    %414 = vmatprep.subr.mxu0 0.0
    %415 = vmatpush2.msra.mxu0 0.0
    %416 = vmatprep.subr.mxu0 0.0
    %417 = vmatpush2.msra.mxu0 0.0
    %418 = vmatprep.subr.mxu0 0.0
    %419 = vmatpush2.msra.mxu0 0.0
    %420 = vmatprep.subr.mxu0 0.0
    %421 = vmatpush2.msra.mxu0 0.0
    %422 = vmatprep.subr.mxu0 0.0
    %423 = vmatpush2.msra.mxu0 0.0
    %424 = vmatprep.subr.mxu0 0.0
    %425 = vmatpush2.msra.mxu0 0.0
    %426 = vmatprep.subr.mxu0 0.0
    %427 = vmatpush2.msra.mxu0 0.0
    %428 = vmatprep.subr.mxu0 0.0
    %429 = vmatpush2.msra.mxu0 0.0
    %430 = vmatprep.subr.mxu0 0.0
    %431 = vmatpush2.msra.mxu0 0.0
    %432 = vmatprep.subr.mxu0 0.0
    %433 = vmatpush2.msra.mxu0 0.0
    %434 = vmatprep.subr.mxu0 0.0
    %435 = vmatpush2.msra.mxu0 0.0
    %436 = vmatprep.subr.mxu0 0.0
    %437 = vmatpush2.msra.mxu0 0.0
    %438 = vmatprep.subr.mxu0 0.0
    %439 = vmatpush2.msra.mxu0 0.0
    %440 = vmatprep.subr.mxu0 0.0
    %441 = vmatpush2.msra.mxu0 0.0
    %442 = vmatprep.subr.mxu0 0.0
    %443 = vmatpush2.msra.mxu0 0.0
    %444 = vmatprep.subr.mxu0 0.0
    %445 = vmatpush2.msra.mxu0 0.0
    %446 = vmatprep.mubr.f32.mxu0 0.0
    %447 = vmatmul.mubr.f32.gmra.mxu0 %v380
    %v448 = vpop.f32.mrf.mxu0
    %v449 = vadd.f32 0.0, %v448
    %v450 = vpop.f32.mrf.mxu0
    %451 = vdwg.mxu0
    %v453 = vrot.slane %v449, 1
    %v456 = vadd.f32 %v365, %v449
    %v457 = vadd.f32 %v370, %v453
    %v458 = vxor.u32 %v456, 2147483648
    %v459 = vxor.u32 %v457, 2147483648
    %v460 = vmul.f32 %v458, 1.442695
    %v461 = vpow.pop %v460
    %v462 = vmul.f32 %v459, 1.442695
    %v463 = vpow.pop %v462
    %v464 = vadd.f32 %v461, 1.0
    %v465 = vadd.f32 %v463, 1.0
    %v466 = vrcp.pop %v464
    %v467 = vmul.f32 1.0, %v466
    %v468 = vrcp.pop %v465
    %v469 = vmul.f32 1.0, %v468
    %v470 = vtanh.pop %v456
    %v471 = vtanh.pop %v457
    %v472 = vmul.f32 %v467, 0.0
    %v473 = vmul.f32 %v469, 0.0
    %476 = vrot.lane.b32.xlu0 %v470, 64
    %v477 = vpop.permute.xlu0 %476
    %478 = vrot.lane.b32.xlu0 %v471, 64
    %v479 = vpop.permute.xlu0 %478
    %v482 = vmul.f32 %v467, %v477
    %v483 = vmul.f32 %v469, %v479
    %486 = vrot.lane.b32.xlu0 %v482, 32
    %v487 = vpop.permute.xlu0 %486
    %488 = vrot.lane.b32.xlu0 %v483, 32
    %v489 = vpop.permute.xlu0 %488
    %v492 = vadd.f32 %v472, %v487
    %v493 = vadd.f32 %v473, %v489
    %v494 = vtanh.pop %v492
    %v495 = vtanh.pop %v493
    %498 = vrot.lane.b32.xlu0 %v494, 64
    %v499 = vpop.permute.xlu0 %498
    %500 = vrot.lane.b32.xlu0 %v495, 64
    %v501 = vpop.permute.xlu0 %500
    %v504 = vmul.f32 %v467, %v499
    %v505 = vmul.f32 %v469, %v501
    %vm506 = vcmp.gt.s32.totalorder %v373, 0
    %v507 = vsel %vm506, 1, 0
    %v508 = vcvt.s32.f32 %v507
    %510 = vset.pattern.permute.xlu0 0
    %511 = vperm.xlu0 %510, %v508
    %v512 = vpop.permute.xlu0 %511
    %v516 = vrot.slane %v505, 7
    %vm517 = vcmask 1041409
    %v518 = vsel %vm517, %v516, %v504
    %519 = vrot.lane.b32.xlu0 %v518, 32
    %v520 = vpop.permute.xlu0 %519
    %v522 = vmul.f32 %v512, %v520
    %v525 = vunpack.c.l.s4 1966171168
    %v526 = vunpack.c.0.s8 %v525
    %v527 = vlaneseq
    %v528 = vshrl.u32 %v527, 7
    %v529 = vsub.s32 %v526, %v528
    %v530 = vrot.slane %v522, %v529
    %v531 = vcombine.high %v530, %v530
    %v533 = vunpack.c.l.s4 1966171168
    %v534 = vunpack.c.0.s8 %v533
    %v535 = vlaneseq
    %v536 = vshrl.u32 %v535, 7
    %v537 = vsub.s32 %v534, %v536
    %v538 = vrot.slane %v530, %v537
    %v540 = vunpack.c.l.s4 1966171168
    %v541 = vunpack.c.0.s8 %v540
    %v542 = vlaneseq
    %v543 = vshrl.u32 %v542, 7
    %v544 = vsub.s32 %v541, %v543
    %v545 = vrot.slane %v531, %v544
    %vm548 = vcmask 253952
    %549 = vst.msk [vmem:[#allocation2] sm:$0x1] %vm548, %v538
    %550 = vst.msk [vmem:[#allocation2 + $0x8] sm:$0x1] %vm548, %v545
    %v551 = vsub.f32 1.0, %v508
    %553 = vset.pattern.permute.xlu0 0
    %554 = vperm.xlu0 %553, %v551
    %v555 = vpop.permute.xlu0 %554
    %v557 = vmul.f32 %v555, %v169
    %v558 = vadd.f32 %v522, %v557
    %v561 = vrot.slane %v493, 7
    %v562 = vsel %vm517, %v561, %v492
    %563 = vrot.lane.b32.xlu0 %v562, 96
    %v564 = vpop.permute.xlu0 %563
    %v566 = vmul.f32 %v512, %v564
    %v567 = vmul.f32 %v555, 0.0
    %v568 = vadd.f32 %v566, %v567
    %v569 = vld [vmem:[%s7] sm:$0xff]
    %v570 = vld [vmem:[%s7 + $0x8] sm:$0xff]
    %v571 = vld [vmem:[%s7 + $0x10] sm:$0xff]
    %v572 = vld [vmem:[%s7 + $0x18] sm:$0xff]
    %v574 = vsel %vm378, %v558, 0
    %576 = vmatprep.subr.mxu0 0.0
    %577 = vmatpush1.msra.mxu0 0.0
    %578 = vmatprep.subr.mxu0 0.0
    %579 = vmatpush1.msra.mxu0 0.0
    %580 = vmatprep.subr.mxu0 0.0
    %581 = vmatpush1.msra.mxu0 0.0
    %582 = vmatprep.subr.mxu0 0.0
    %583 = vmatpush1.msra.mxu0 0.0
    %584 = vmatprep.subr.mxu0 0.0
    %585 = vmatpush1.msra.mxu0 0.0
    %586 = vmatprep.subr.mxu0 0.0
    %587 = vmatpush1.msra.mxu0 0.0
    %588 = vmatprep.subr.mxu0 0.0
    %589 = vmatpush1.msra.mxu0 0.0
    %590 = vmatprep.subr.mxu0 0.0
    %591 = vmatpush1.msra.mxu0 0.0
    %592 = vmatprep.subr.mxu0 0.0
    %593 = vmatpush1.msra.mxu0 0.0
    %594 = vmatprep.subr.mxu0 0.0
    %595 = vmatpush1.msra.mxu0 0.0
    %596 = vmatprep.subr.mxu0 0.0
    %597 = vmatpush1.msra.mxu0 0.0
    %598 = vmatprep.subr.mxu0 0.0
    %599 = vmatpush1.msra.mxu0 0.0
    %600 = vmatprep.subr.mxu0 0.0
    %601 = vmatpush1.msra.mxu0 %v572
    %602 = vmatprep.subr.mxu0 0.0
    %603 = vmatpush1.msra.mxu0 %v571
    %604 = vmatprep.subr.mxu0 0.0
    %605 = vmatpush1.msra.mxu0 %v570
    %606 = vmatprep.subr.mxu0 0.0
    %607 = vmatpush1.msra.mxu0 %v569
    %608 = vmatprep.subr.mxu0 0.0
    %609 = vmatpush2.msra.mxu0 0.0
    %610 = vmatprep.subr.mxu0 0.0
    %611 = vmatpush2.msra.mxu0 0.0
    %612 = vmatprep.subr.mxu0 0.0
    %613 = vmatpush2.msra.mxu0 0.0
    %614 = vmatprep.subr.mxu0 0.0
    %615 = vmatpush2.msra.mxu0 0.0
    %616 = vmatprep.subr.mxu0 0.0
    %617 = vmatpush2.msra.mxu0 0.0
    %618 = vmatprep.subr.mxu0 0.0
    %619 = vmatpush2.msra.mxu0 0.0
    %620 = vmatprep.subr.mxu0 0.0
    %621 = vmatpush2.msra.mxu0 0.0
    %622 = vmatprep.subr.mxu0 0.0
    %623 = vmatpush2.msra.mxu0 0.0
    %624 = vmatprep.subr.mxu0 0.0
    %625 = vmatpush2.msra.mxu0 0.0
    %626 = vmatprep.subr.mxu0 0.0
    %627 = vmatpush2.msra.mxu0 0.0
    %628 = vmatprep.subr.mxu0 0.0
    %629 = vmatpush2.msra.mxu0 0.0
    %630 = vmatprep.subr.mxu0 0.0
    %631 = vmatpush2.msra.mxu0 0.0
    %632 = vmatprep.subr.mxu0 0.0
    %633 = vmatpush2.msra.mxu0 0.0
    %634 = vmatprep.subr.mxu0 0.0
    %635 = vmatpush2.msra.mxu0 0.0
    %636 = vmatprep.subr.mxu0 0.0
    %637 = vmatpush2.msra.mxu0 0.0
    %638 = vmatprep.subr.mxu0 0.0
    %639 = vmatpush2.msra.mxu0 0.0
    %640 = vmatprep.mubr.f32.mxu0 0.0
    %641 = vmatmul.mubr.f32.gmra.mxu0 %v574
    %v642 = vpop.f32.mrf.mxu0
    %v643 = vadd.f32 0.0, %v642
    %v644 = vpop.f32.mrf.mxu0
    %645 = vdwg.mxu0
    %v647 = vrot.slane %v643, 7
    %v650 = vadd.f32 %v365, %v647
    %v651 = vadd.f32 %v370, %v643
    %v652 = vxor.u32 %v650, 2147483648
    %v653 = vxor.u32 %v651, 2147483648
    %v654 = vmul.f32 %v652, 1.442695
    %v655 = vpow.pop %v654
    %v656 = vmul.f32 %v653, 1.442695
    %v657 = vpow.pop %v656
    %v658 = vadd.f32 %v655, 1.0
    %v659 = vadd.f32 %v657, 1.0
    %v660 = vrcp.pop %v658
    %v661 = vmul.f32 1.0, %v660
    %v662 = vrcp.pop %v659
    %v663 = vmul.f32 1.0, %v662
    %v664 = vtanh.pop %v650
    %v665 = vtanh.pop %v651
    %v667 = vrot.slane %v568, 7
    %668 = vrot.lane.b32.xlu0 %v667, 32
    %v669 = vpop.permute.xlu0 %668
    %670 = vrot.lane.b32.xlu0 %v568, 32
    %v671 = vpop.permute.xlu0 %670
    %v674 = vmul.f32 %v661, %v669
    %v675 = vmul.f32 %v663, %v671
    %678 = vrot.lane.b32.xlu0 %v664, 64
    %v679 = vpop.permute.xlu0 %678
    %680 = vrot.lane.b32.xlu0 %v665, 64
    %v681 = vpop.permute.xlu0 %680
    %v684 = vmul.f32 %v661, %v679
    %v685 = vmul.f32 %v663, %v681
    %688 = vrot.lane.b32.xlu0 %v684, 32
    %v689 = vpop.permute.xlu0 %688
    %690 = vrot.lane.b32.xlu0 %v685, 32
    %v691 = vpop.permute.xlu0 %690
    %v694 = vadd.f32 %v674, %v689
    %v695 = vadd.f32 %v675, %v691
    %v696 = vtanh.pop %v694
    %v697 = vtanh.pop %v695
    %700 = vrot.lane.b32.xlu0 %v696, 64
    %v701 = vpop.permute.xlu0 %700
    %702 = vrot.lane.b32.xlu0 %v697, 64
    %v703 = vpop.permute.xlu0 %702
    %v706 = vmul.f32 %v661, %v701
    %v707 = vmul.f32 %v663, %v703
    %vm708 = vcmp.gt.s32.totalorder %v373, 1
    %v709 = vsel %vm708, 1, 0
    %v710 = vcvt.s32.f32 %v709
    %712 = vset.pattern.permute.xlu0 0
    %713 = vperm.xlu0 %712, %v710
    %v714 = vpop.permute.xlu0 %713
    %v718 = vrot.slane %v706, 1
    %v719 = vsel %vm517, %v707, %v718
    %720 = vrot.lane.b32.xlu0 %v719, 32
    %v721 = vpop.permute.xlu0 %720
    %v723 = vmul.f32 %v714, %v721
    %v726 = vunpack.c.l.s4 1966171168
    %v727 = vunpack.c.0.s8 %v726
    %v728 = vlaneseq
    %v729 = vshrl.u32 %v728, 7
    %v730 = vsub.s32 %v727, %v729
    %v731 = vrot.slane %v723, %v730
    %v732 = vcombine.high %v731, %v731
    %v734 = vunpack.c.l.s4 1966171168
    %v735 = vunpack.c.0.s8 %v734
    %v736 = vlaneseq
    %v737 = vshrl.u32 %v736, 7
    %v738 = vsub.s32 %v735, %v737
    %v739 = vrot.slane %v731, %v738
    %v741 = vunpack.c.l.s4 1966171168
    %v742 = vunpack.c.0.s8 %v741
    %v743 = vlaneseq
    %v744 = vshrl.u32 %v743, 7
    %v745 = vsub.s32 %v742, %v744
    %v746 = vrot.slane %v732, %v745
    %749 = vst.msk [vmem:[#allocation2 + $0x1] sm:$0x1] %vm548, %v739
    %750 = vst.msk [vmem:[#allocation2 + $0x9] sm:$0x1] %vm548, %v746
    %v751 = vsub.f32 1.0, %v710
    %753 = vset.pattern.permute.xlu0 0
    %754 = vperm.xlu0 %753, %v751
    %v755 = vpop.permute.xlu0 %754
    %v757 = vmul.f32 %v755, %v558
    %v758 = vadd.f32 %v723, %v757
    %v761 = vrot.slane %v694, 1
    %v762 = vsel %vm517, %v695, %v761
    %763 = vrot.lane.b32.xlu0 %v762, 96
    %v764 = vpop.permute.xlu0 %763
    %v766 = vmul.f32 %v714, %v764
    %v767 = vmul.f32 %v755, %v568
    %v768 = vadd.f32 %v766, %v767
    %v769 = vld [vmem:[%s7] sm:$0xff]
    %v770 = vld [vmem:[%s7 + $0x8] sm:$0xff]
    %v771 = vld [vmem:[%s7 + $0x10] sm:$0xff]
    %v772 = vld [vmem:[%s7 + $0x18] sm:$0xff]
    %v774 = vsel %vm378, %v758, 0
    %776 = vmatprep.subr.mxu0 0.0
    %777 = vmatpush1.msra.mxu0 0.0
    %778 = vmatprep.subr.mxu0 0.0
    %779 = vmatpush1.msra.mxu0 0.0
    %780 = vmatprep.subr.mxu0 0.0
    %781 = vmatpush1.msra.mxu0 0.0
    %782 = vmatprep.subr.mxu0 0.0
    %783 = vmatpush1.msra.mxu0 0.0
    %784 = vmatprep.subr.mxu0 0.0
    %785 = vmatpush1.msra.mxu0 0.0
    %786 = vmatprep.subr.mxu0 0.0
    %787 = vmatpush1.msra.mxu0 0.0
    %788 = vmatprep.subr.mxu0 0.0
    %789 = vmatpush1.msra.mxu0 0.0
    %790 = vmatprep.subr.mxu0 0.0
    %791 = vmatpush1.msra.mxu0 0.0
    %792 = vmatprep.subr.mxu0 0.0
    %793 = vmatpush1.msra.mxu0 0.0
    %794 = vmatprep.subr.mxu0 0.0
    %795 = vmatpush1.msra.mxu0 0.0
    %796 = vmatprep.subr.mxu0 0.0
    %797 = vmatpush1.msra.mxu0 0.0
    %798 = vmatprep.subr.mxu0 0.0
    %799 = vmatpush1.msra.mxu0 0.0
    %800 = vmatprep.subr.mxu0 0.0
    %801 = vmatpush1.msra.mxu0 %v772
    %802 = vmatprep.subr.mxu0 0.0
    %803 = vmatpush1.msra.mxu0 %v771
    %804 = vmatprep.subr.mxu0 0.0
    %805 = vmatpush1.msra.mxu0 %v770
    %806 = vmatprep.subr.mxu0 0.0
    %807 = vmatpush1.msra.mxu0 %v769
    %808 = vmatprep.subr.mxu0 0.0
    %809 = vmatpush2.msra.mxu0 0.0
    %810 = vmatprep.subr.mxu0 0.0
    %811 = vmatpush2.msra.mxu0 0.0
    %812 = vmatprep.subr.mxu0 0.0
    %813 = vmatpush2.msra.mxu0 0.0
    %814 = vmatprep.subr.mxu0 0.0
    %815 = vmatpush2.msra.mxu0 0.0
    %816 = vmatprep.subr.mxu0 0.0
    %817 = vmatpush2.msra.mxu0 0.0
    %818 = vmatprep.subr.mxu0 0.0
    %819 = vmatpush2.msra.mxu0 0.0
    %820 = vmatprep.subr.mxu0 0.0
    %821 = vmatpush2.msra.mxu0 0.0
    %822 = vmatprep.subr.mxu0 0.0
    %823 = vmatpush2.msra.mxu0 0.0
    %824 = vmatprep.subr.mxu0 0.0
    %825 = vmatpush2.msra.mxu0 0.0
    %826 = vmatprep.subr.mxu0 0.0
    %827 = vmatpush2.msra.mxu0 0.0
    %828 = vmatprep.subr.mxu0 0.0
    %829 = vmatpush2.msra.mxu0 0.0
    %830 = vmatprep.subr.mxu0 0.0
    %831 = vmatpush2.msra.mxu0 0.0
    %832 = vmatprep.subr.mxu0 0.0
    %833 = vmatpush2.msra.mxu0 0.0
    %834 = vmatprep.subr.mxu0 0.0
    %835 = vmatpush2.msra.mxu0 0.0
    %836 = vmatprep.subr.mxu0 0.0
    %837 = vmatpush2.msra.mxu0 0.0
    %838 = vmatprep.subr.mxu0 0.0
    %839 = vmatpush2.msra.mxu0 0.0
    %840 = vmatprep.mubr.f32.mxu0 0.0
    %841 = vmatmul.mubr.f32.gmra.mxu0 %v774
    %v842 = vpop.f32.mrf.mxu0
    %v843 = vadd.f32 0.0, %v842
    %v844 = vpop.f32.mrf.mxu0
    %845 = vdwg.mxu0
    %v847 = vrot.slane %v843, 6
    %v848 = vrot.slane %v843, 7
    %v851 = vadd.f32 %v365, %v847
    %v852 = vadd.f32 %v370, %v848
    %v853 = vxor.u32 %v851, 2147483648
    %v854 = vxor.u32 %v852, 2147483648
    %v855 = vmul.f32 %v853, 1.442695
    %v856 = vpow.pop %v855
    %v857 = vmul.f32 %v854, 1.442695
    %v858 = vpow.pop %v857
    %v859 = vadd.f32 %v856, 1.0
    %v860 = vadd.f32 %v858, 1.0
    %v861 = vrcp.pop %v859
    %v862 = vmul.f32 1.0, %v861
    %v863 = vrcp.pop %v860
    %v864 = vmul.f32 1.0, %v863
    %v865 = vtanh.pop %v851
    %v866 = vtanh.pop %v852
    %v868 = vrot.slane %v768, 6
    %v869 = vrot.slane %v768, 7
    %870 = vrot.lane.b32.xlu0 %v868, 32
    %v871 = vpop.permute.xlu0 %870
    %872 = vrot.lane.b32.xlu0 %v869, 32
    %v873 = vpop.permute.xlu0 %872
    %v876 = vmul.f32 %v862, %v871
    %v877 = vmul.f32 %v864, %v873
    %880 = vrot.lane.b32.xlu0 %v865, 64
    %v881 = vpop.permute.xlu0 %880
    %882 = vrot.lane.b32.xlu0 %v866, 64
    %v883 = vpop.permute.xlu0 %882
    %v886 = vmul.f32 %v862, %v881
    %v887 = vmul.f32 %v864, %v883
    %890 = vrot.lane.b32.xlu0 %v886, 32
    %v891 = vpop.permute.xlu0 %890
    %892 = vrot.lane.b32.xlu0 %v887, 32
    %v893 = vpop.permute.xlu0 %892
    %v896 = vadd.f32 %v876, %v891
    %v897 = vadd.f32 %v877, %v893
    %v898 = vtanh.pop %v896
    %v899 = vtanh.pop %v897
    %902 = vrot.lane.b32.xlu0 %v898, 64
    %v903 = vpop.permute.xlu0 %902
    %904 = vrot.lane.b32.xlu0 %v899, 64
    %v905 = vpop.permute.xlu0 %904
    %v908 = vmul.f32 %v862, %v903
    %v909 = vmul.f32 %v864, %v905
    %vm910 = vcmp.gt.s32.totalorder %v373, 2
    %v911 = vsel %vm910, 1, 0
    %v912 = vcvt.s32.f32 %v911
    %914 = vset.pattern.permute.xlu0 0
    %915 = vperm.xlu0 %914, %v912
    %v916 = vpop.permute.xlu0 %915
    %v920 = vrot.slane %v908, 2
    %v921 = vrot.slane %v909, 1
    %v922 = vsel %vm517, %v921, %v920
    %923 = vrot.lane.b32.xlu0 %v922, 32
    %v924 = vpop.permute.xlu0 %923
    %v926 = vmul.f32 %v916, %v924
    %v929 = vunpack.c.l.s4 1966171168
    %v930 = vunpack.c.0.s8 %v929
    %v931 = vlaneseq
    %v932 = vshrl.u32 %v931, 7
    %v933 = vsub.s32 %v930, %v932
    %v934 = vrot.slane %v926, %v933
    %v935 = vcombine.high %v934, %v934
    %v937 = vunpack.c.l.s4 1966171168
    %v938 = vunpack.c.0.s8 %v937
    %v939 = vlaneseq
    %v940 = vshrl.u32 %v939, 7
    %v941 = vsub.s32 %v938, %v940
    %v942 = vrot.slane %v934, %v941
    %v944 = vunpack.c.l.s4 1966171168
    %v945 = vunpack.c.0.s8 %v944
    %v946 = vlaneseq
    %v947 = vshrl.u32 %v946, 7
    %v948 = vsub.s32 %v945, %v947
    %v949 = vrot.slane %v935, %v948
    %952 = vst.msk [vmem:[#allocation2 + $0x2] sm:$0x1] %vm548, %v942
    %953 = vst.msk [vmem:[#allocation2 + $0xa] sm:$0x1] %vm548, %v949
    %v954 = vsub.f32 1.0, %v912
    %956 = vset.pattern.permute.xlu0 0
    %957 = vperm.xlu0 %956, %v954
    %v958 = vpop.permute.xlu0 %957
    %v960 = vmul.f32 %v958, %v758
    %v961 = vadd.f32 %v926, %v960
    %v964 = vrot.slane %v896, 2
    %v965 = vrot.slane %v897, 1
    %v966 = vsel %vm517, %v965, %v964
    %967 = vrot.lane.b32.xlu0 %v966, 96
    %v968 = vpop.permute.xlu0 %967
    %v970 = vmul.f32 %v916, %v968
    %v971 = vmul.f32 %v958, %v768
    %v972 = vadd.f32 %v970, %v971
    %v973 = vld [vmem:[%s7] sm:$0xff]
    %v974 = vld [vmem:[%s7 + $0x8] sm:$0xff]
    %v975 = vld [vmem:[%s7 + $0x10] sm:$0xff]
    %v976 = vld [vmem:[%s7 + $0x18] sm:$0xff]
    %v978 = vsel %vm378, %v961, 0
    %980 = vmatprep.subr.mxu0 0.0
    %981 = vmatpush1.msra.mxu0 0.0
    %982 = vmatprep.subr.mxu0 0.0
    %983 = vmatpush1.msra.mxu0 0.0
    %984 = vmatprep.subr.mxu0 0.0
    %985 = vmatpush1.msra.mxu0 0.0
    %986 = vmatprep.subr.mxu0 0.0
    %987 = vmatpush1.msra.mxu0 0.0
    %988 = vmatprep.subr.mxu0 0.0
    %989 = vmatpush1.msra.mxu0 0.0
    %990 = vmatprep.subr.mxu0 0.0
    %991 = vmatpush1.msra.mxu0 0.0
    %992 = vmatprep.subr.mxu0 0.0
    %993 = vmatpush1.msra.mxu0 0.0
    %994 = vmatprep.subr.mxu0 0.0
    %995 = vmatpush1.msra.mxu0 0.0
    %996 = vmatprep.subr.mxu0 0.0
    %997 = vmatpush1.msra.mxu0 0.0
    %998 = vmatprep.subr.mxu0 0.0
    %999 = vmatpush1.msra.mxu0 0.0
    %1000 = vmatprep.subr.mxu0 0.0
    %1001 = vmatpush1.msra.mxu0 0.0
    %1002 = vmatprep.subr.mxu0 0.0
    %1003 = vmatpush1.msra.mxu0 0.0
    %1004 = vmatprep.subr.mxu0 0.0
    %1005 = vmatpush1.msra.mxu0 %v976
    %1006 = vmatprep.subr.mxu0 0.0
    %1007 = vmatpush1.msra.mxu0 %v975
    %1008 = vmatprep.subr.mxu0 0.0
    %1009 = vmatpush1.msra.mxu0 %v974
    %1010 = vmatprep.subr.mxu0 0.0
    %1011 = vmatpush1.msra.mxu0 %v973
    %1012 = vmatprep.subr.mxu0 0.0
    %1013 = vmatpush2.msra.mxu0 0.0
    %1014 = vmatprep.subr.mxu0 0.0
    %1015 = vmatpush2.msra.mxu0 0.0
    %1016 = vmatprep.subr.mxu0 0.0
    %1017 = vmatpush2.msra.mxu0 0.0
    %1018 = vmatprep.subr.mxu0 0.0
    %1019 = vmatpush2.msra.mxu0 0.0
    %1020 = vmatprep.subr.mxu0 0.0
    %1021 = vmatpush2.msra.mxu0 0.0
    %1022 = vmatprep.subr.mxu0 0.0
    %1023 = vmatpush2.msra.mxu0 0.0
    %1024 = vmatprep.subr.mxu0 0.0
    %1025 = vmatpush2.msra.mxu0 0.0
    %1026 = vmatprep.subr.mxu0 0.0
    %1027 = vmatpush2.msra.mxu0 0.0
    %1028 = vmatprep.subr.mxu0 0.0
    %1029 = vmatpush2.msra.mxu0 0.0
    %1030 = vmatprep.subr.mxu0 0.0
    %1031 = vmatpush2.msra.mxu0 0.0
    %1032 = vmatprep.subr.mxu0 0.0
    %1033 = vmatpush2.msra.mxu0 0.0
    %1034 = vmatprep.subr.mxu0 0.0
    %1035 = vmatpush2.msra.mxu0 0.0
    %1036 = vmatprep.subr.mxu0 0.0
    %1037 = vmatpush2.msra.mxu0 0.0
    %1038 = vmatprep.subr.mxu0 0.0
    %1039 = vmatpush2.msra.mxu0 0.0
    %1040 = vmatprep.subr.mxu0 0.0
    %1041 = vmatpush2.msra.mxu0 0.0
    %1042 = vmatprep.subr.mxu0 0.0
    %1043 = vmatpush2.msra.mxu0 0.0
    %1044 = vmatprep.mubr.f32.mxu0 0.0
    %1045 = vmatmul.mubr.f32.gmra.mxu0 %v978
    %v1046 = vpop.f32.mrf.mxu0
    %v1047 = vadd.f32 0.0, %v1046
    %v1048 = vpop.f32.mrf.mxu0
    %1049 = vdwg.mxu0
    %v1051 = vrot.slane %v1047, 5
    %v1052 = vrot.slane %v1047, 6
    %v1055 = vadd.f32 %v365, %v1051
    %v1056 = vadd.f32 %v370, %v1052
    %v1057 = vxor.u32 %v1055, 2147483648
    %v1058 = vxor.u32 %v1056, 2147483648
    %v1059 = vmul.f32 %v1057, 1.442695
    %v1060 = vpow.pop %v1059
    %v1061 = vmul.f32 %v1058, 1.442695
    %v1062 = vpow.pop %v1061
    %v1063 = vadd.f32 %v1060, 1.0
    %v1064 = vadd.f32 %v1062, 1.0
    %v1065 = vrcp.pop %v1063
    %v1066 = vmul.f32 1.0, %v1065
    %v1067 = vrcp.pop %v1064
    %v1068 = vmul.f32 1.0, %v1067
    %v1069 = vtanh.pop %v1055
    %v1070 = vtanh.pop %v1056
    %v1072 = vrot.slane %v972, 5
    %v1073 = vrot.slane %v972, 6
    %1074 = vrot.lane.b32.xlu0 %v1072, 32
    %v1075 = vpop.permute.xlu0 %1074
    %1076 = vrot.lane.b32.xlu0 %v1073, 32
    %v1077 = vpop.permute.xlu0 %1076
    %v1080 = vmul.f32 %v1066, %v1075
    %v1081 = vmul.f32 %v1068, %v1077
    %1084 = vrot.lane.b32.xlu0 %v1069, 64
    %v1085 = vpop.permute.xlu0 %1084
    %1086 = vrot.lane.b32.xlu0 %v1070, 64
    %v1087 = vpop.permute.xlu0 %1086
    %v1090 = vmul.f32 %v1066, %v1085
    %v1091 = vmul.f32 %v1068, %v1087
    %1094 = vrot.lane.b32.xlu0 %v1090, 32
    %v1095 = vpop.permute.xlu0 %1094
    %1096 = vrot.lane.b32.xlu0 %v1091, 32
    %v1097 = vpop.permute.xlu0 %1096
    %v1100 = vadd.f32 %v1080, %v1095
    %v1101 = vadd.f32 %v1081, %v1097
    %v1102 = vtanh.pop %v1100
    %v1103 = vtanh.pop %v1101
    %1106 = vrot.lane.b32.xlu0 %v1102, 64
    %v1107 = vpop.permute.xlu0 %1106
    %1108 = vrot.lane.b32.xlu0 %v1103, 64
    %v1109 = vpop.permute.xlu0 %1108
    %v1112 = vmul.f32 %v1066, %v1107
    %v1113 = vmul.f32 %v1068, %v1109
    %vm1114 = vcmp.gt.s32.totalorder %v373, 3
    %v1115 = vsel %vm1114, 1, 0
    %v1116 = vcvt.s32.f32 %v1115
    %1118 = vset.pattern.permute.xlu0 0
    %1119 = vperm.xlu0 %1118, %v1116
    %v1120 = vpop.permute.xlu0 %1119
    %v1124 = vrot.slane %v1112, 3
    %v1125 = vrot.slane %v1113, 2
    %v1126 = vsel %vm517, %v1125, %v1124
    %1127 = vrot.lane.b32.xlu0 %v1126, 32
    %v1128 = vpop.permute.xlu0 %1127
    %v1130 = vmul.f32 %v1120, %v1128
    %v1133 = vunpack.c.l.s4 1966171168
    %v1134 = vunpack.c.0.s8 %v1133
    %v1135 = vlaneseq
    %v1136 = vshrl.u32 %v1135, 7
    %v1137 = vsub.s32 %v1134, %v1136
    %v1138 = vrot.slane %v1130, %v1137
    %v1139 = vcombine.high %v1138, %v1138
    %v1141 = vunpack.c.l.s4 1966171168
    %v1142 = vunpack.c.0.s8 %v1141
    %v1143 = vlaneseq
    %v1144 = vshrl.u32 %v1143, 7
    %v1145 = vsub.s32 %v1142, %v1144
    %v1146 = vrot.slane %v1138, %v1145
    %v1148 = vunpack.c.l.s4 1966171168
    %v1149 = vunpack.c.0.s8 %v1148
    %v1150 = vlaneseq
    %v1151 = vshrl.u32 %v1150, 7
    %v1152 = vsub.s32 %v1149, %v1151
    %v1153 = vrot.slane %v1139, %v1152
    %1156 = vst.msk [vmem:[#allocation2 + $0x3] sm:$0x1] %vm548, %v1146
    %1157 = vst.msk [vmem:[#allocation2 + $0xb] sm:$0x1] %vm548, %v1153
    %v1158 = vsub.f32 1.0, %v1116
    %1160 = vset.pattern.permute.xlu0 0
    %1161 = vperm.xlu0 %1160, %v1158
    %v1162 = vpop.permute.xlu0 %1161
    %v1164 = vmul.f32 %v1162, %v961
    %v1165 = vadd.f32 %v1130, %v1164
    %v1168 = vrot.slane %v1100, 3
    %v1169 = vrot.slane %v1101, 2
    %v1170 = vsel %vm517, %v1169, %v1168
    %1171 = vrot.lane.b32.xlu0 %v1170, 96
    %v1172 = vpop.permute.xlu0 %1171
    %v1174 = vmul.f32 %v1120, %v1172
    %v1175 = vmul.f32 %v1162, %v972
    %v1176 = vadd.f32 %v1174, %v1175
    %v1177 = vld [vmem:[%s7] sm:$0xff]
    %v1178 = vld [vmem:[%s7 + $0x8] sm:$0xff]
    %v1179 = vld [vmem:[%s7 + $0x10] sm:$0xff]
    %v1180 = vld [vmem:[%s7 + $0x18] sm:$0xff]
    %v1182 = vsel %vm378, %v1165, 0
    %1184 = vmatprep.subr.mxu0 0.0
    %1185 = vmatpush1.msra.mxu0 0.0
    %1186 = vmatprep.subr.mxu0 0.0
    %1187 = vmatpush1.msra.mxu0 0.0
    %1188 = vmatprep.subr.mxu0 0.0
    %1189 = vmatpush1.msra.mxu0 0.0
    %1190 = vmatprep.subr.mxu0 0.0
    %1191 = vmatpush1.msra.mxu0 0.0
    %1192 = vmatprep.subr.mxu0 0.0
    %1193 = vmatpush1.msra.mxu0 0.0
    %1194 = vmatprep.subr.mxu0 0.0
    %1195 = vmatpush1.msra.mxu0 0.0
    %1196 = vmatprep.subr.mxu0 0.0
    %1197 = vmatpush1.msra.mxu0 0.0
    %1198 = vmatprep.subr.mxu0 0.0
    %1199 = vmatpush1.msra.mxu0 0.0
    %1200 = vmatprep.subr.mxu0 0.0
    %1201 = vmatpush1.msra.mxu0 0.0
    %1202 = vmatprep.subr.mxu0 0.0
    %1203 = vmatpush1.msra.mxu0 0.0
    %1204 = vmatprep.subr.mxu0 0.0
    %1205 = vmatpush1.msra.mxu0 0.0
    %1206 = vmatprep.subr.mxu0 0.0
    %1207 = vmatpush1.msra.mxu0 0.0
    %1208 = vmatprep.subr.mxu0 0.0
    %1209 = vmatpush1.msra.mxu0 %v1180
    %1210 = vmatprep.subr.mxu0 0.0
    %1211 = vmatpush1.msra.mxu0 %v1179
    %1212 = vmatprep.subr.mxu0 0.0
    %1213 = vmatpush1.msra.mxu0 %v1178
    %1214 = vmatprep.subr.mxu0 0.0
    %1215 = vmatpush1.msra.mxu0 %v1177
    %1216 = vmatprep.subr.mxu0 0.0
    %1217 = vmatpush2.msra.mxu0 0.0
    %1218 = vmatprep.subr.mxu0 0.0
    %1219 = vmatpush2.msra.mxu0 0.0
    %1220 = vmatprep.subr.mxu0 0.0
    %1221 = vmatpush2.msra.mxu0 0.0
    %1222 = vmatprep.subr.mxu0 0.0
    %1223 = vmatpush2.msra.mxu0 0.0
    %1224 = vmatprep.subr.mxu0 0.0
    %1225 = vmatpush2.msra.mxu0 0.0
    %1226 = vmatprep.subr.mxu0 0.0
    %1227 = vmatpush2.msra.mxu0 0.0
    %1228 = vmatprep.subr.mxu0 0.0
    %1229 = vmatpush2.msra.mxu0 0.0
    %1230 = vmatprep.subr.mxu0 0.0
    %1231 = vmatpush2.msra.mxu0 0.0
    %1232 = vmatprep.subr.mxu0 0.0
    %1233 = vmatpush2.msra.mxu0 0.0
    %1234 = vmatprep.subr.mxu0 0.0
    %1235 = vmatpush2.msra.mxu0 0.0
    %1236 = vmatprep.subr.mxu0 0.0
    %1237 = vmatpush2.msra.mxu0 0.0
    %1238 = vmatprep.subr.mxu0 0.0
    %1239 = vmatpush2.msra.mxu0 0.0
    %1240 = vmatprep.subr.mxu0 0.0
    %1241 = vmatpush2.msra.mxu0 0.0
    %1242 = vmatprep.subr.mxu0 0.0
    %1243 = vmatpush2.msra.mxu0 0.0
    %1244 = vmatprep.subr.mxu0 0.0
    %1245 = vmatpush2.msra.mxu0 0.0
    %1246 = vmatprep.subr.mxu0 0.0
    %1247 = vmatpush2.msra.mxu0 0.0
    %1248 = vmatprep.mubr.f32.mxu0 0.0
    %1249 = vmatmul.mubr.f32.gmra.mxu0 %v1182
    %v1250 = vpop.f32.mrf.mxu0
    %v1251 = vadd.f32 0.0, %v1250
    %v1252 = vpop.f32.mrf.mxu0
    %1253 = vdwg.mxu0
    %v1255 = vrot.slane %v1251, 4
    %v1256 = vrot.slane %v1251, 5
    %v1259 = vadd.f32 %v365, %v1255
    %v1260 = vadd.f32 %v370, %v1256
    %v1261 = vxor.u32 %v1259, 2147483648
    %v1262 = vxor.u32 %v1260, 2147483648
    %v1263 = vmul.f32 %v1261, 1.442695
    %v1264 = vpow.pop %v1263
    %v1265 = vmul.f32 %v1262, 1.442695
    %v1266 = vpow.pop %v1265
    %v1267 = vadd.f32 %v1264, 1.0
    %v1268 = vadd.f32 %v1266, 1.0
    %v1269 = vrcp.pop %v1267
    %v1270 = vmul.f32 1.0, %v1269
    %v1271 = vrcp.pop %v1268
    %v1272 = vmul.f32 1.0, %v1271
    %v1273 = vtanh.pop %v1259
    %v1274 = vtanh.pop %v1260
    %v1276 = vrot.slane %v1176, 4
    %v1277 = vrot.slane %v1176, 5
    %1278 = vrot.lane.b32.xlu0 %v1276, 32
    %v1279 = vpop.permute.xlu0 %1278
    %1280 = vrot.lane.b32.xlu0 %v1277, 32
    %v1281 = vpop.permute.xlu0 %1280
    %v1284 = vmul.f32 %v1270, %v1279
    %v1285 = vmul.f32 %v1272, %v1281
    %1288 = vrot.lane.b32.xlu0 %v1273, 64
    %v1289 = vpop.permute.xlu0 %1288
    %1290 = vrot.lane.b32.xlu0 %v1274, 64
    %v1291 = vpop.permute.xlu0 %1290
    %v1294 = vmul.f32 %v1270, %v1289
    %v1295 = vmul.f32 %v1272, %v1291
    %1298 = vrot.lane.b32.xlu0 %v1294, 32
    %v1299 = vpop.permute.xlu0 %1298
    %1300 = vrot.lane.b32.xlu0 %v1295, 32
    %v1301 = vpop.permute.xlu0 %1300
    %v1304 = vadd.f32 %v1284, %v1299
    %v1305 = vadd.f32 %v1285, %v1301
    %v1306 = vtanh.pop %v1304
    %v1307 = vtanh.pop %v1305
    %1310 = vrot.lane.b32.xlu0 %v1306, 64
    %v1311 = vpop.permute.xlu0 %1310
    %1312 = vrot.lane.b32.xlu0 %v1307, 64
    %v1313 = vpop.permute.xlu0 %1312
    %v1316 = vmul.f32 %v1270, %v1311
    %v1317 = vmul.f32 %v1272, %v1313
    %vm1318 = vcmp.gt.s32.totalorder %v373, 4
    %v1319 = vsel %vm1318, 1, 0
    %v1320 = vcvt.s32.f32 %v1319
    %1322 = vset.pattern.permute.xlu0 0
    %1323 = vperm.xlu0 %1322, %v1320
    %v1324 = vpop.permute.xlu0 %1323
    %v1328 = vrot.slane %v1316, 4
    %v1329 = vrot.slane %v1317, 3
    %v1330 = vsel %vm517, %v1329, %v1328
    %1331 = vrot.lane.b32.xlu0 %v1330, 32
    %v1332 = vpop.permute.xlu0 %1331
    %v1334 = vmul.f32 %v1324, %v1332
    %v1337 = vunpack.c.l.s4 1966171168
    %v1338 = vunpack.c.0.s8 %v1337
    %v1339 = vlaneseq
    %v1340 = vshrl.u32 %v1339, 7
    %v1341 = vsub.s32 %v1338, %v1340
    %v1342 = vrot.slane %v1334, %v1341
    %v1343 = vcombine.high %v1342, %v1342
    %v1345 = vunpack.c.l.s4 1966171168
    %v1346 = vunpack.c.0.s8 %v1345
    %v1347 = vlaneseq
    %v1348 = vshrl.u32 %v1347, 7
    %v1349 = vsub.s32 %v1346, %v1348
    %v1350 = vrot.slane %v1342, %v1349
    %v1352 = vunpack.c.l.s4 1966171168
    %v1353 = vunpack.c.0.s8 %v1352
    %v1354 = vlaneseq
    %v1355 = vshrl.u32 %v1354, 7
    %v1356 = vsub.s32 %v1353, %v1355
    %v1357 = vrot.slane %v1343, %v1356
    %1360 = vst.msk [vmem:[#allocation2 + $0x4] sm:$0x1] %vm548, %v1350
    %1361 = vst.msk [vmem:[#allocation2 + $0xc] sm:$0x1] %vm548, %v1357
    %v1362 = vsub.f32 1.0, %v1320
    %1364 = vset.pattern.permute.xlu0 0
    %1365 = vperm.xlu0 %1364, %v1362
    %v1366 = vpop.permute.xlu0 %1365
    %v1368 = vmul.f32 %v1366, %v1165
    %v1369 = vadd.f32 %v1334, %v1368
    %v1372 = vrot.slane %v1304, 4
    %v1373 = vrot.slane %v1305, 3
    %v1374 = vsel %vm517, %v1373, %v1372
    %1375 = vrot.lane.b32.xlu0 %v1374, 96
    %v1376 = vpop.permute.xlu0 %1375
    %v1378 = vmul.f32 %v1324, %v1376
    %v1379 = vmul.f32 %v1366, %v1176
    %v1380 = vadd.f32 %v1378, %v1379
    %v1381 = vld [vmem:[%s7] sm:$0xff]
    %v1382 = vld [vmem:[%s7 + $0x8] sm:$0xff]
    %v1383 = vld [vmem:[%s7 + $0x10] sm:$0xff]
    %v1384 = vld [vmem:[%s7 + $0x18] sm:$0xff]
    %v1386 = vsel %vm378, %v1369, 0
    %1388 = vmatprep.subr.mxu0 0.0
    %1389 = vmatpush1.msra.mxu0 0.0
    %1390 = vmatprep.subr.mxu0 0.0
    %1391 = vmatpush1.msra.mxu0 0.0
    %1392 = vmatprep.subr.mxu0 0.0
    %1393 = vmatpush1.msra.mxu0 0.0
    %1394 = vmatprep.subr.mxu0 0.0
    %1395 = vmatpush1.msra.mxu0 0.0
    %1396 = vmatprep.subr.mxu0 0.0
    %1397 = vmatpush1.msra.mxu0 0.0
    %1398 = vmatprep.subr.mxu0 0.0
    %1399 = vmatpush1.msra.mxu0 0.0
    %1400 = vmatprep.subr.mxu0 0.0
    %1401 = vmatpush1.msra.mxu0 0.0
    %1402 = vmatprep.subr.mxu0 0.0
    %1403 = vmatpush1.msra.mxu0 0.0
    %1404 = vmatprep.subr.mxu0 0.0
    %1405 = vmatpush1.msra.mxu0 0.0
    %1406 = vmatprep.subr.mxu0 0.0
    %1407 = vmatpush1.msra.mxu0 0.0
    %1408 = vmatprep.subr.mxu0 0.0
    %1409 = vmatpush1.msra.mxu0 0.0
    %1410 = vmatprep.subr.mxu0 0.0
    %1411 = vmatpush1.msra.mxu0 0.0
    %1412 = vmatprep.subr.mxu0 0.0
    %1413 = vmatpush1.msra.mxu0 %v1384
    %1414 = vmatprep.subr.mxu0 0.0
    %1415 = vmatpush1.msra.mxu0 %v1383
    %1416 = vmatprep.subr.mxu0 0.0
    %1417 = vmatpush1.msra.mxu0 %v1382
    %1418 = vmatprep.subr.mxu0 0.0
    %1419 = vmatpush1.msra.mxu0 %v1381
    %1420 = vmatprep.subr.mxu0 0.0
    %1421 = vmatpush2.msra.mxu0 0.0
    %1422 = vmatprep.subr.mxu0 0.0
    %1423 = vmatpush2.msra.mxu0 0.0
    %1424 = vmatprep.subr.mxu0 0.0
    %1425 = vmatpush2.msra.mxu0 0.0
    %1426 = vmatprep.subr.mxu0 0.0
    %1427 = vmatpush2.msra.mxu0 0.0
    %1428 = vmatprep.subr.mxu0 0.0
    %1429 = vmatpush2.msra.mxu0 0.0
    %1430 = vmatprep.subr.mxu0 0.0
    %1431 = vmatpush2.msra.mxu0 0.0
    %1432 = vmatprep.subr.mxu0 0.0
    %1433 = vmatpush2.msra.mxu0 0.0
    %1434 = vmatprep.subr.mxu0 0.0
    %1435 = vmatpush2.msra.mxu0 0.0
    %1436 = vmatprep.subr.mxu0 0.0
    %1437 = vmatpush2.msra.mxu0 0.0
    %1438 = vmatprep.subr.mxu0 0.0
    %1439 = vmatpush2.msra.mxu0 0.0
    %1440 = vmatprep.subr.mxu0 0.0
    %1441 = vmatpush2.msra.mxu0 0.0
    %1442 = vmatprep.subr.mxu0 0.0
    %1443 = vmatpush2.msra.mxu0 0.0
    %1444 = vmatprep.subr.mxu0 0.0
    %1445 = vmatpush2.msra.mxu0 0.0
    %1446 = vmatprep.subr.mxu0 0.0
    %1447 = vmatpush2.msra.mxu0 0.0
    %1448 = vmatprep.subr.mxu0 0.0
    %1449 = vmatpush2.msra.mxu0 0.0
    %1450 = vmatprep.subr.mxu0 0.0
    %1451 = vmatpush2.msra.mxu0 0.0
    %1452 = vmatprep.mubr.f32.mxu0 0.0
    %1453 = vmatmul.mubr.f32.gmra.mxu0 %v1386
    %v1454 = vpop.f32.mrf.mxu0
    %v1455 = vadd.f32 0.0, %v1454
    %v1456 = vpop.f32.mrf.mxu0
    %1457 = vdwg.mxu0
    %v1459 = vrot.slane %v1455, 3
    %v1460 = vrot.slane %v1455, 4
    %v1463 = vadd.f32 %v365, %v1459
    %v1464 = vadd.f32 %v370, %v1460
    %v1465 = vxor.u32 %v1463, 2147483648
    %v1466 = vxor.u32 %v1464, 2147483648
    %v1467 = vmul.f32 %v1465, 1.442695
    %v1468 = vpow.pop %v1467
    %v1469 = vmul.f32 %v1466, 1.442695
    %v1470 = vpow.pop %v1469
    %v1471 = vadd.f32 %v1468, 1.0
    %v1472 = vadd.f32 %v1470, 1.0
    %v1473 = vrcp.pop %v1471
    %v1474 = vmul.f32 1.0, %v1473
    %v1475 = vrcp.pop %v1472
    %v1476 = vmul.f32 1.0, %v1475
    %v1477 = vtanh.pop %v1463
    %v1478 = vtanh.pop %v1464
    %v1480 = vrot.slane %v1380, 3
    %v1481 = vrot.slane %v1380, 4
    %1482 = vrot.lane.b32.xlu0 %v1480, 32
    %v1483 = vpop.permute.xlu0 %1482
    %1484 = vrot.lane.b32.xlu0 %v1481, 32
    %v1485 = vpop.permute.xlu0 %1484
    %v1488 = vmul.f32 %v1474, %v1483
    %v1489 = vmul.f32 %v1476, %v1485
    %1492 = vrot.lane.b32.xlu0 %v1477, 64
    %v1493 = vpop.permute.xlu0 %1492
    %1494 = vrot.lane.b32.xlu0 %v1478, 64
    %v1495 = vpop.permute.xlu0 %1494
    %v1498 = vmul.f32 %v1474, %v1493
    %v1499 = vmul.f32 %v1476, %v1495
    %1502 = vrot.lane.b32.xlu0 %v1498, 32
    %v1503 = vpop.permute.xlu0 %1502
    %1504 = vrot.lane.b32.xlu0 %v1499, 32
    %v1505 = vpop.permute.xlu0 %1504
    %v1508 = vadd.f32 %v1488, %v1503
    %v1509 = vadd.f32 %v1489, %v1505
    %v1510 = vtanh.pop %v1508
    %v1511 = vtanh.pop %v1509
    %1514 = vrot.lane.b32.xlu0 %v1510, 64
    %v1515 = vpop.permute.xlu0 %1514
    %1516 = vrot.lane.b32.xlu0 %v1511, 64
    %v1517 = vpop.permute.xlu0 %1516
    %v1520 = vmul.f32 %v1474, %v1515
    %v1521 = vmul.f32 %v1476, %v1517
    %vm1522 = vcmp.gt.s32.totalorder %v373, 5
    %v1523 = vsel %vm1522, 1, 0
    %v1524 = vcvt.s32.f32 %v1523
    %1526 = vset.pattern.permute.xlu0 0
    %1527 = vperm.xlu0 %1526, %v1524
    %v1528 = vpop.permute.xlu0 %1527
    %v1532 = vrot.slane %v1520, 5
    %v1533 = vrot.slane %v1521, 4
    %v1534 = vsel %vm517, %v1533, %v1532
    %1535 = vrot.lane.b32.xlu0 %v1534, 32
    %v1536 = vpop.permute.xlu0 %1535
    %v1538 = vmul.f32 %v1528, %v1536
    %v1541 = vunpack.c.l.s4 1966171168
    %v1542 = vunpack.c.0.s8 %v1541
    %v1543 = vlaneseq
    %v1544 = vshrl.u32 %v1543, 7
    %v1545 = vsub.s32 %v1542, %v1544
    %v1546 = vrot.slane %v1538, %v1545
    %v1547 = vcombine.high %v1546, %v1546
    %v1549 = vunpack.c.l.s4 1966171168
    %v1550 = vunpack.c.0.s8 %v1549
    %v1551 = vlaneseq
    %v1552 = vshrl.u32 %v1551, 7
    %v1553 = vsub.s32 %v1550, %v1552
    %v1554 = vrot.slane %v1546, %v1553
    %v1556 = vunpack.c.l.s4 1966171168
    %v1557 = vunpack.c.0.s8 %v1556
    %v1558 = vlaneseq
    %v1559 = vshrl.u32 %v1558, 7
    %v1560 = vsub.s32 %v1557, %v1559
    %v1561 = vrot.slane %v1547, %v1560
    %1564 = vst.msk [vmem:[#allocation2 + $0x5] sm:$0x1] %vm548, %v1554
    %1565 = vst.msk [vmem:[#allocation2 + $0xd] sm:$0x1] %vm548, %v1561
    %v1566 = vsub.f32 1.0, %v1524
    %1568 = vset.pattern.permute.xlu0 0
    %1569 = vperm.xlu0 %1568, %v1566
    %v1570 = vpop.permute.xlu0 %1569
    %v1572 = vmul.f32 %v1570, %v1369
    %v1573 = vadd.f32 %v1538, %v1572
    %v1576 = vrot.slane %v1508, 5
    %v1577 = vrot.slane %v1509, 4
    %v1578 = vsel %vm517, %v1577, %v1576
    %1579 = vrot.lane.b32.xlu0 %v1578, 96
    %v1580 = vpop.permute.xlu0 %1579
    %v1582 = vmul.f32 %v1528, %v1580
    %v1583 = vmul.f32 %v1570, %v1380
    %v1584 = vadd.f32 %v1582, %v1583
    %v1585 = vld [vmem:[%s7] sm:$0xff]
    %v1586 = vld [vmem:[%s7 + $0x8] sm:$0xff]
    %v1587 = vld [vmem:[%s7 + $0x10] sm:$0xff]
    %v1588 = vld [vmem:[%s7 + $0x18] sm:$0xff]
    %v1590 = vsel %vm378, %v1573, 0
    %1592 = vmatprep.subr.mxu0 0.0
    %1593 = vmatpush1.msra.mxu0 0.0
    %1594 = vmatprep.subr.mxu0 0.0
    %1595 = vmatpush1.msra.mxu0 0.0
    %1596 = vmatprep.subr.mxu0 0.0
    %1597 = vmatpush1.msra.mxu0 0.0
    %1598 = vmatprep.subr.mxu0 0.0
    %1599 = vmatpush1.msra.mxu0 0.0
    %1600 = vmatprep.subr.mxu0 0.0
    %1601 = vmatpush1.msra.mxu0 0.0
    %1602 = vmatprep.subr.mxu0 0.0
    %1603 = vmatpush1.msra.mxu0 0.0
    %1604 = vmatprep.subr.mxu0 0.0
    %1605 = vmatpush1.msra.mxu0 0.0
    %1606 = vmatprep.subr.mxu0 0.0
    %1607 = vmatpush1.msra.mxu0 0.0
    %1608 = vmatprep.subr.mxu0 0.0
    %1609 = vmatpush1.msra.mxu0 0.0
    %1610 = vmatprep.subr.mxu0 0.0
    %1611 = vmatpush1.msra.mxu0 0.0
    %1612 = vmatprep.subr.mxu0 0.0
    %1613 = vmatpush1.msra.mxu0 0.0
    %1614 = vmatprep.subr.mxu0 0.0
    %1615 = vmatpush1.msra.mxu0 0.0
    %1616 = vmatprep.subr.mxu0 0.0
    %1617 = vmatpush1.msra.mxu0 %v1588
    %1618 = vmatprep.subr.mxu0 0.0
    %1619 = vmatpush1.msra.mxu0 %v1587
    %1620 = vmatprep.subr.mxu0 0.0
    %1621 = vmatpush1.msra.mxu0 %v1586
    %1622 = vmatprep.subr.mxu0 0.0
    %1623 = vmatpush1.msra.mxu0 %v1585
    %1624 = vmatprep.subr.mxu0 0.0
    %1625 = vmatpush2.msra.mxu0 0.0
    %1626 = vmatprep.subr.mxu0 0.0
    %1627 = vmatpush2.msra.mxu0 0.0
    %1628 = vmatprep.subr.mxu0 0.0
    %1629 = vmatpush2.msra.mxu0 0.0
    %1630 = vmatprep.subr.mxu0 0.0
    %1631 = vmatpush2.msra.mxu0 0.0
    %1632 = vmatprep.subr.mxu0 0.0
    %1633 = vmatpush2.msra.mxu0 0.0
    %1634 = vmatprep.subr.mxu0 0.0
    %1635 = vmatpush2.msra.mxu0 0.0
    %1636 = vmatprep.subr.mxu0 0.0
    %1637 = vmatpush2.msra.mxu0 0.0
    %1638 = vmatprep.subr.mxu0 0.0
    %1639 = vmatpush2.msra.mxu0 0.0
    %1640 = vmatprep.subr.mxu0 0.0
    %1641 = vmatpush2.msra.mxu0 0.0
    %1642 = vmatprep.subr.mxu0 0.0
    %1643 = vmatpush2.msra.mxu0 0.0
    %1644 = vmatprep.subr.mxu0 0.0
    %1645 = vmatpush2.msra.mxu0 0.0
    %1646 = vmatprep.subr.mxu0 0.0
    %1647 = vmatpush2.msra.mxu0 0.0
    %1648 = vmatprep.subr.mxu0 0.0
    %1649 = vmatpush2.msra.mxu0 0.0
    %1650 = vmatprep.subr.mxu0 0.0
    %1651 = vmatpush2.msra.mxu0 0.0
    %1652 = vmatprep.subr.mxu0 0.0
    %1653 = vmatpush2.msra.mxu0 0.0
    %1654 = vmatprep.subr.mxu0 0.0
    %1655 = vmatpush2.msra.mxu0 0.0
    %1656 = vmatprep.mubr.f32.mxu0 0.0
    %1657 = vmatmul.mubr.f32.gmra.mxu0 %v1590
    %v1658 = vpop.f32.mrf.mxu0
    %v1659 = vadd.f32 0.0, %v1658
    %v1660 = vpop.f32.mrf.mxu0
    %1661 = vdwg.mxu0
    %v1663 = vrot.slane %v1659, 2
    %v1664 = vrot.slane %v1659, 3
    %v1667 = vadd.f32 %v365, %v1663
    %v1668 = vadd.f32 %v370, %v1664
    %v1669 = vxor.u32 %v1667, 2147483648
    %v1670 = vxor.u32 %v1668, 2147483648
    %v1671 = vmul.f32 %v1669, 1.442695
    %v1672 = vpow.pop %v1671
    %v1673 = vmul.f32 %v1670, 1.442695
    %v1674 = vpow.pop %v1673
    %v1675 = vadd.f32 %v1672, 1.0
    %v1676 = vadd.f32 %v1674, 1.0
    %v1677 = vrcp.pop %v1675
    %v1678 = vmul.f32 1.0, %v1677
    %v1679 = vrcp.pop %v1676
    %v1680 = vmul.f32 1.0, %v1679
    %v1681 = vtanh.pop %v1667
    %v1682 = vtanh.pop %v1668
    %v1684 = vrot.slane %v1584, 2
    %v1685 = vrot.slane %v1584, 3
    %1686 = vrot.lane.b32.xlu0 %v1684, 32
    %v1687 = vpop.permute.xlu0 %1686
    %1688 = vrot.lane.b32.xlu0 %v1685, 32
    %v1689 = vpop.permute.xlu0 %1688
    %v1692 = vmul.f32 %v1678, %v1687
    %v1693 = vmul.f32 %v1680, %v1689
    %1696 = vrot.lane.b32.xlu0 %v1681, 64
    %v1697 = vpop.permute.xlu0 %1696
    %1698 = vrot.lane.b32.xlu0 %v1682, 64
    %v1699 = vpop.permute.xlu0 %1698
    %v1702 = vmul.f32 %v1678, %v1697
    %v1703 = vmul.f32 %v1680, %v1699
    %1706 = vrot.lane.b32.xlu0 %v1702, 32
    %v1707 = vpop.permute.xlu0 %1706
    %1708 = vrot.lane.b32.xlu0 %v1703, 32
    %v1709 = vpop.permute.xlu0 %1708
    %v1712 = vadd.f32 %v1692, %v1707
    %v1713 = vadd.f32 %v1693, %v1709
    %v1714 = vtanh.pop %v1712
    %v1715 = vtanh.pop %v1713
    %1718 = vrot.lane.b32.xlu0 %v1714, 64
    %v1719 = vpop.permute.xlu0 %1718
    %1720 = vrot.lane.b32.xlu0 %v1715, 64
    %v1721 = vpop.permute.xlu0 %1720
    %v1724 = vmul.f32 %v1678, %v1719
    %v1725 = vmul.f32 %v1680, %v1721
    %vm1726 = vcmp.gt.s32.totalorder %v373, 6
    %v1727 = vsel %vm1726, 1, 0
    %v1728 = vcvt.s32.f32 %v1727
    %1730 = vset.pattern.permute.xlu0 0
    %1731 = vperm.xlu0 %1730, %v1728
    %v1732 = vpop.permute.xlu0 %1731
    %v1736 = vrot.slane %v1724, 6
    %v1737 = vrot.slane %v1725, 5
    %v1738 = vsel %vm517, %v1737, %v1736
    %1739 = vrot.lane.b32.xlu0 %v1738, 32
    %v1740 = vpop.permute.xlu0 %1739
    %v1742 = vmul.f32 %v1732, %v1740
    %v1745 = vunpack.c.l.s4 1966171168
    %v1746 = vunpack.c.0.s8 %v1745
    %v1747 = vlaneseq
    %v1748 = vshrl.u32 %v1747, 7
    %v1749 = vsub.s32 %v1746, %v1748
    %v1750 = vrot.slane %v1742, %v1749
    %v1751 = vcombine.high %v1750, %v1750
    %v1753 = vunpack.c.l.s4 1966171168
    %v1754 = vunpack.c.0.s8 %v1753
    %v1755 = vlaneseq
    %v1756 = vshrl.u32 %v1755, 7
    %v1757 = vsub.s32 %v1754, %v1756
    %v1758 = vrot.slane %v1750, %v1757
    %v1760 = vunpack.c.l.s4 1966171168
    %v1761 = vunpack.c.0.s8 %v1760
    %v1762 = vlaneseq
    %v1763 = vshrl.u32 %v1762, 7
    %v1764 = vsub.s32 %v1761, %v1763
    %v1765 = vrot.slane %v1751, %v1764
    %1768 = vst.msk [vmem:[#allocation2 + $0x6] sm:$0x1] %vm548, %v1758
    %1769 = vst.msk [vmem:[#allocation2 + $0xe] sm:$0x1] %vm548, %v1765
    %v1770 = vsub.f32 1.0, %v1728
    %1772 = vset.pattern.permute.xlu0 0
    %1773 = vperm.xlu0 %1772, %v1770
    %v1774 = vpop.permute.xlu0 %1773
    %v1776 = vmul.f32 %v1774, %v1573
    %v1777 = vadd.f32 %v1742, %v1776
    %v1780 = vrot.slane %v1712, 6
    %v1781 = vrot.slane %v1713, 5
    %v1782 = vsel %vm517, %v1781, %v1780
    %1783 = vrot.lane.b32.xlu0 %v1782, 96
    %v1784 = vpop.permute.xlu0 %1783
    %v1786 = vmul.f32 %v1732, %v1784
    %v1787 = vmul.f32 %v1774, %v1584
    %v1788 = vadd.f32 %v1786, %v1787
    %v1789 = vld [vmem:[%s7] sm:$0xff]
    %v1790 = vld [vmem:[%s7 + $0x8] sm:$0xff]
    %v1791 = vld [vmem:[%s7 + $0x10] sm:$0xff]
    %v1792 = vld [vmem:[%s7 + $0x18] sm:$0xff]
    %v1794 = vsel %vm378, %v1777, 0
    %1796 = vmatprep.subr.mxu0 0.0
    %1797 = vmatpush1.msra.mxu0 0.0
    %1798 = vmatprep.subr.mxu0 0.0
    %1799 = vmatpush1.msra.mxu0 0.0
    %1800 = vmatprep.subr.mxu0 0.0
    %1801 = vmatpush1.msra.mxu0 0.0
    %1802 = vmatprep.subr.mxu0 0.0
    %1803 = vmatpush1.msra.mxu0 0.0
    %1804 = vmatprep.subr.mxu0 0.0
    %1805 = vmatpush1.msra.mxu0 0.0
    %1806 = vmatprep.subr.mxu0 0.0
    %1807 = vmatpush1.msra.mxu0 0.0
    %1808 = vmatprep.subr.mxu0 0.0
    %1809 = vmatpush1.msra.mxu0 0.0
    %1810 = vmatprep.subr.mxu0 0.0
    %1811 = vmatpush1.msra.mxu0 0.0
    %1812 = vmatprep.subr.mxu0 0.0
    %1813 = vmatpush1.msra.mxu0 0.0
    %1814 = vmatprep.subr.mxu0 0.0
    %1815 = vmatpush1.msra.mxu0 0.0
    %1816 = vmatprep.subr.mxu0 0.0
    %1817 = vmatpush1.msra.mxu0 0.0
    %1818 = vmatprep.subr.mxu0 0.0
    %1819 = vmatpush1.msra.mxu0 0.0
    %1820 = vmatprep.subr.mxu0 0.0
    %1821 = vmatpush1.msra.mxu0 %v1792
    %1822 = vmatprep.subr.mxu0 0.0
    %1823 = vmatpush1.msra.mxu0 %v1791
    %1824 = vmatprep.subr.mxu0 0.0
    %1825 = vmatpush1.msra.mxu0 %v1790
    %1826 = vmatprep.subr.mxu0 0.0
    %1827 = vmatpush1.msra.mxu0 %v1789
    %1828 = vmatprep.subr.mxu0 0.0
    %1829 = vmatpush2.msra.mxu0 0.0
    %1830 = vmatprep.subr.mxu0 0.0
    %1831 = vmatpush2.msra.mxu0 0.0
    %1832 = vmatprep.subr.mxu0 0.0
    %1833 = vmatpush2.msra.mxu0 0.0
    %1834 = vmatprep.subr.mxu0 0.0
    %1835 = vmatpush2.msra.mxu0 0.0
    %1836 = vmatprep.subr.mxu0 0.0
    %1837 = vmatpush2.msra.mxu0 0.0
    %1838 = vmatprep.subr.mxu0 0.0
    %1839 = vmatpush2.msra.mxu0 0.0
    %1840 = vmatprep.subr.mxu0 0.0
    %1841 = vmatpush2.msra.mxu0 0.0
    %1842 = vmatprep.subr.mxu0 0.0
    %1843 = vmatpush2.msra.mxu0 0.0
    %1844 = vmatprep.subr.mxu0 0.0
    %1845 = vmatpush2.msra.mxu0 0.0
    %1846 = vmatprep.subr.mxu0 0.0
    %1847 = vmatpush2.msra.mxu0 0.0
    %1848 = vmatprep.subr.mxu0 0.0
    %1849 = vmatpush2.msra.mxu0 0.0
    %1850 = vmatprep.subr.mxu0 0.0
    %1851 = vmatpush2.msra.mxu0 0.0
    %1852 = vmatprep.subr.mxu0 0.0
    %1853 = vmatpush2.msra.mxu0 0.0
    %1854 = vmatprep.subr.mxu0 0.0
    %1855 = vmatpush2.msra.mxu0 0.0
    %1856 = vmatprep.subr.mxu0 0.0
    %1857 = vmatpush2.msra.mxu0 0.0
    %1858 = vmatprep.subr.mxu0 0.0
    %1859 = vmatpush2.msra.mxu0 0.0
    %1860 = vmatprep.mubr.f32.mxu0 0.0
    %1861 = vmatmul.mubr.f32.gmra.mxu0 %v1794
    %v1862 = vpop.f32.mrf.mxu0
    %v1863 = vadd.f32 0.0, %v1862
    %v1864 = vpop.f32.mrf.mxu0
    %1865 = vdwg.mxu0
    %v1867 = vrot.slane %v1863, 1
    %v1868 = vrot.slane %v1863, 2
    %v1871 = vadd.f32 %v365, %v1867
    %v1872 = vadd.f32 %v370, %v1868
    %v1873 = vxor.u32 %v1871, 2147483648
    %v1874 = vxor.u32 %v1872, 2147483648
    %v1875 = vmul.f32 %v1873, 1.442695
    %v1876 = vpow.pop %v1875
    %v1877 = vmul.f32 %v1874, 1.442695
    %v1878 = vpow.pop %v1877
    %v1879 = vadd.f32 %v1876, 1.0
    %v1880 = vadd.f32 %v1878, 1.0
    %v1881 = vrcp.pop %v1879
    %v1882 = vmul.f32 1.0, %v1881
    %v1883 = vrcp.pop %v1880
    %v1884 = vmul.f32 1.0, %v1883
    %v1885 = vtanh.pop %v1871
    %v1886 = vtanh.pop %v1872
    %v1888 = vrot.slane %v1788, 1
    %v1889 = vrot.slane %v1788, 2
    %1890 = vrot.lane.b32.xlu0 %v1888, 32
    %v1891 = vpop.permute.xlu0 %1890
    %1892 = vrot.lane.b32.xlu0 %v1889, 32
    %v1893 = vpop.permute.xlu0 %1892
    %v1896 = vmul.f32 %v1882, %v1891
    %v1897 = vmul.f32 %v1884, %v1893
    %1900 = vrot.lane.b32.xlu0 %v1885, 64
    %v1901 = vpop.permute.xlu0 %1900
    %1902 = vrot.lane.b32.xlu0 %v1886, 64
    %v1903 = vpop.permute.xlu0 %1902
    %v1906 = vmul.f32 %v1882, %v1901
    %v1907 = vmul.f32 %v1884, %v1903
    %1910 = vrot.lane.b32.xlu0 %v1906, 32
    %v1911 = vpop.permute.xlu0 %1910
    %1912 = vrot.lane.b32.xlu0 %v1907, 32
    %v1913 = vpop.permute.xlu0 %1912
    %v1916 = vadd.f32 %v1896, %v1911
    %v1917 = vadd.f32 %v1897, %v1913
    %v1918 = vtanh.pop %v1916
    %v1919 = vtanh.pop %v1917
    %1922 = vrot.lane.b32.xlu0 %v1918, 64
    %v1923 = vpop.permute.xlu0 %1922
    %1924 = vrot.lane.b32.xlu0 %v1919, 64
    %v1925 = vpop.permute.xlu0 %1924
    %v1928 = vmul.f32 %v1882, %v1923
    %v1929 = vmul.f32 %v1884, %v1925
    %vm1930 = vcmp.gt.s32.totalorder %v373, 7
    %v1931 = vsel %vm1930, 1, 0
    %v1932 = vcvt.s32.f32 %v1931
    %1934 = vset.pattern.permute.xlu0 0
    %1935 = vperm.xlu0 %1934, %v1932
    %v1936 = vpop.permute.xlu0 %1935
    %v1940 = vrot.slane %v1928, 7
    %v1941 = vrot.slane %v1929, 6
    %v1942 = vsel %vm517, %v1941, %v1940
    %1943 = vrot.lane.b32.xlu0 %v1942, 32
    %v1944 = vpop.permute.xlu0 %1943
    %v1946 = vmul.f32 %v1936, %v1944
    %v1949 = vunpack.c.l.s4 1966171168
    %v1950 = vunpack.c.0.s8 %v1949
    %v1951 = vlaneseq
    %v1952 = vshrl.u32 %v1951, 7
    %v1953 = vsub.s32 %v1950, %v1952
    %v1954 = vrot.slane %v1946, %v1953
    %v1955 = vcombine.high %v1954, %v1954
    %v1957 = vunpack.c.l.s4 1966171168
    %v1958 = vunpack.c.0.s8 %v1957
    %v1959 = vlaneseq
    %v1960 = vshrl.u32 %v1959, 7
    %v1961 = vsub.s32 %v1958, %v1960
    %v1962 = vrot.slane %v1954, %v1961
    %v1964 = vunpack.c.l.s4 1966171168
    %v1965 = vunpack.c.0.s8 %v1964
    %v1966 = vlaneseq
    %v1967 = vshrl.u32 %v1966, 7
    %v1968 = vsub.s32 %v1965, %v1967
    %v1969 = vrot.slane %v1955, %v1968
    %1972 = vst.msk [vmem:[#allocation2 + $0x7] sm:$0x1] %vm548, %v1962
    %1973 = vst.msk [vmem:[#allocation2 + $0xf] sm:$0x1] %vm548, %v1969
    %v1974 = vld [vmem:[#allocation2] sm:$0xff]
    %v1975 = vld [vmem:[#allocation2 + $0x8] sm:$0xff]
    %v1976 = vld [vmem:[%s9] sm:$0xff]
    %v1977 = vld [vmem:[%s9 + $0x8] sm:$0xff]
    %v1978 = vld [vmem:[%s9 + $0x10] sm:$0xff]
    %v1979 = vld [vmem:[%s9 + $0x18] sm:$0xff]
    %v1980 = vld [vmem:[#allocation9] sm:$0x1]
    %v1982 = vlaneseq
    %v1983 = vshrl.u32 %v1982, 7
    %v1984 = vsub.s32 0, %v1983
    %v1985 = vrot.slane %v1980, %v1984
    %v1988 = vsel %vm378, %v1974, 0
    %v1991 = vsel %vm378, %v1975, 0
    %1993 = vmatprep.subr.mxu0 0.0
    %1994 = vmatpush1.msra.mxu0 0.0
    %1995 = vmatprep.subr.mxu0 0.0
    %1996 = vmatpush1.msra.mxu0 0.0
    %1997 = vmatprep.subr.mxu0 0.0
    %1998 = vmatpush1.msra.mxu0 0.0
    %1999 = vmatprep.subr.mxu0 0.0
    %2000 = vmatpush1.msra.mxu0 0.0
    %2001 = vmatprep.subr.mxu0 0.0
    %2002 = vmatpush1.msra.mxu0 0.0
    %2003 = vmatprep.subr.mxu0 0.0
    %2004 = vmatpush1.msra.mxu0 0.0
    %2005 = vmatprep.subr.mxu0 0.0
    %2006 = vmatpush1.msra.mxu0 0.0
    %2007 = vmatprep.subr.mxu0 0.0
    %2008 = vmatpush1.msra.mxu0 0.0
    %2009 = vmatprep.subr.mxu0 0.0
    %2010 = vmatpush1.msra.mxu0 0.0
    %2011 = vmatprep.subr.mxu0 0.0
    %2012 = vmatpush1.msra.mxu0 0.0
    %2013 = vmatprep.subr.mxu0 0.0
    %2014 = vmatpush1.msra.mxu0 0.0
    %2015 = vmatprep.subr.mxu0 0.0
    %2016 = vmatpush1.msra.mxu0 0.0
    %2017 = vmatprep.subr.mxu0 0.0
    %2018 = vmatpush1.msra.mxu0 %v1979
    %2019 = vmatprep.subr.mxu0 0.0
    %2020 = vmatpush1.msra.mxu0 %v1978
    %2021 = vmatprep.subr.mxu0 0.0
    %2022 = vmatpush1.msra.mxu0 %v1977
    %2023 = vmatprep.subr.mxu0 0.0
    %2024 = vmatpush1.msra.mxu0 %v1976
    %2025 = vmatprep.subr.mxu0 0.0
    %2026 = vmatpush2.msra.mxu0 0.0
    %2027 = vmatprep.subr.mxu0 0.0
    %2028 = vmatpush2.msra.mxu0 0.0
    %2029 = vmatprep.subr.mxu0 0.0
    %2030 = vmatpush2.msra.mxu0 0.0
    %2031 = vmatprep.subr.mxu0 0.0
    %2032 = vmatpush2.msra.mxu0 0.0
    %2033 = vmatprep.subr.mxu0 0.0
    %2034 = vmatpush2.msra.mxu0 0.0
    %2035 = vmatprep.subr.mxu0 0.0
    %2036 = vmatpush2.msra.mxu0 0.0
    %2037 = vmatprep.subr.mxu0 0.0
    %2038 = vmatpush2.msra.mxu0 0.0
    %2039 = vmatprep.subr.mxu0 0.0
    %2040 = vmatpush2.msra.mxu0 0.0
    %2041 = vmatprep.subr.mxu0 0.0
    %2042 = vmatpush2.msra.mxu0 0.0
    %2043 = vmatprep.subr.mxu0 0.0
    %2044 = vmatpush2.msra.mxu0 0.0
    %2045 = vmatprep.subr.mxu0 0.0
    %2046 = vmatpush2.msra.mxu0 0.0
    %2047 = vmatprep.subr.mxu0 0.0
    %2048 = vmatpush2.msra.mxu0 0.0
    %2049 = vmatprep.subr.mxu0 0.0
    %2050 = vmatpush2.msra.mxu0 0.0
    %2051 = vmatprep.subr.mxu0 0.0
    %2052 = vmatpush2.msra.mxu0 0.0
    %2053 = vmatprep.subr.mxu0 0.0
    %2054 = vmatpush2.msra.mxu0 0.0
    %2055 = vmatprep.subr.mxu0 0.0
    %2056 = vmatpush2.msra.mxu0 0.0
    %2057 = vmatprep.mubr.f32.mxu0 0.0
    %2058 = vmatmul.mubr.f32.gmra.mxu0 %v1988
    %v2059 = vpop.f32.mrf.mxu0
    %v2060 = vadd.f32 %v1985, %v2059
    %v2061 = vpop.f32.mrf.mxu0
    %2062 = vmatprep.mubr.f32.mxu0 0.0
    %2063 = vmatmul.mubr.f32.gmra.mxu0 %v1991
    %v2064 = vpop.f32.mrf.mxu0
    %v2065 = vadd.f32 %v1985, %v2064
    %v2066 = vpop.f32.mrf.mxu0
    %2067 = vdwg.mxu0
    %v2068 = vsel %vm197, %v2060, -inf
    %2069 = vmax.xlane.f32.xlu0 %v2068
    %v2070 = vpop.xlane.xlu0 %2069
    %v2071 = vsel %vm197, %v2065, -inf
    %2072 = vmax.xlane.f32.xlu0 %v2071
    %v2073 = vpop.xlane.xlu0 %2072
    %v2074 = vsub.f32 %v2060, %v2070
    %v2075 = vsub.f32 %v2065, %v2073
    %v2076 = vmul.f32 %v2074, 1.442695
    %v2077 = vpow.pop %v2076
    %v2078 = vmul.f32 %v2075, 1.442695
    %v2079 = vpow.pop %v2078
    %v2080 = vsel %vm197, %v2077, 0.0
    %2081 = vadd.xlane.f32.xlu0 %v2080
    %v2082 = vpop.xlane.xlu0 %2081
    %v2083 = vsel %vm197, %v2079, 0.0
    %2084 = vadd.xlane.f32.xlu0 %v2083
    %v2085 = vpop.xlane.xlu0 %2084
    %v2086 = vlog2.pop %v2082
    %v2087 = vmul.f32 %v2086, 0.6931472
    %v2088 = vlog2.pop %v2085
    %v2089 = vmul.f32 %v2088, 0.6931472
    %v2090 = vsub.f32 %v2074, %v2087
    %v2091 = vsub.f32 %v2075, %v2089
    %2092 = vst.msk [vmem:[#allocation11] sm:$0xff] %vm197, %v2090
    %2093 = vst.msk [vmem:[#allocation11 + $0x8] sm:$0xff] %vm197, %v2091
    // Predicated region
    $region62: #{decoder_v0_forward.1} parent=1 // pred_check
      _
    $region63: #{decoder_v0_forward.1} parent=1 // pred_check_branch
      %2095 = sbr.rel (0) target = $region65
    $region64: #{decoder_v0_forward.1} parent=1 // pred_region
      %s2097 = ssub.s32 256, 256
      %2098 = vsyncadd [#allocation5], %s2097
      %s2099 = sshll.u32 [#allocation11], 4
      %s2100 = int_to_ptr.vmem [resolvable:$true] %s2099
      %2105 = dma.vmem_to_hbm [thread:$0]  %s2100, 256, %s11, [#allocation5], 128, 128, 8
    $region65: #{decoder_v0_forward.1} parent=1 // pred_fallthru
      _
    // Predicated region
    $region66: #{decoder_v0_forward.1} parent=1 // pred_check
      _
    $region67: #{decoder_v0_forward.1} parent=1 // pred_check_branch
      %2107 = sbr.rel (0) target = $region69
    $region68: #{decoder_v0_forward.1} parent=1 // pred_region
      %2108 = dma.done [#allocation5], 256
    $region69: #{decoder_v0_forward.1} parent=1 // pred_fallthru
      _
    %2109 = vsyncpa [#allocation4], 1
    %2110 = vsyncpa [#allocation7], 1
    %2111 = vsyncpa [#allocation10], 1
    %2112 = vsyncpa [#allocation5], 1

</llo_original>
